<compile_context>
chip_gen: v6e
topology: v6e:2x2x1
jax: 0.10.0
libtpu: 0.0.40
codegen_flags: <defaults>
</compile_context>

<pallas_src>
import jax
import jax.numpy as jnp
from jax.experimental import pallas as pl
from jax.experimental.pallas import tpu as pltpu


def _round_up(x: int, m: int) -> int:
    return ((x + m - 1) // m) * m


def _cdiv(a: int, b: int) -> int:
    return -(-a // b)


def _vmem_capacity_bytes() -> int:
    try:
        return int(pltpu.get_tpu_info().vmem_capacity_bytes)
    except Exception:
        return 64 * 1024 * 1024  # conservative default (v7x per-TC VMEM)


# ----------------------------------------------------------------------------
# Kernels
# ----------------------------------------------------------------------------
def _gate_math(x, y_relu, rx, zx, gx, ry, zy, gy, zb, out_dtype):
    # All gate pre-activations are already f32 (MXU accumulation dtype).
    r = jax.nn.sigmoid(rx + ry)
    z = jax.nn.sigmoid(zx + zy - zb)
    h = jnp.tanh(gy + r * gx)
    out = (1.0 - z) * x.astype(jnp.float32) + h * y_relu.astype(jnp.float32)
    return out.astype(out_dtype)


def gru_gate_kernel_wide(x_ref, y_ref, uw_ref, ww_ref, zb_ref, out_ref):
    """Wide path: uw_ref/ww_ref are (D, 3D) == U.weight.T / W.weight.T.

    Only used when D % 128 == 0 so the gate slices below are lane-aligned.
    2 MXU matmuls instead of 6.
    """
    D = x_ref.shape[-1]
    x = x_ref[...]                                  # native dtype
    y = jnp.maximum(y_ref[...], 0)                  # relu in native dtype

    xu = jnp.dot(x, uw_ref[...], preferred_element_type=jnp.float32)
    yw = jnp.dot(y, ww_ref[...], preferred_element_type=jnp.float32)

    rx, zx, gx = xu[:, :D], xu[:, D:2 * D], xu[:, 2 * D:]
    ry, zy, gy = yw[:, :D], yw[:, D:2 * D], yw[:, 2 * D:]

    zb = zb_ref[...].astype(jnp.float32)            # (1, D) broadcasts over rows
    out_ref[...] = _gate_math(x, y, rx, zx, gx, ry, zy, gy, zb, out_ref.dtype)


def gru_gate_kernel_stack(x_ref, y_ref, uw_ref, ww_ref, zb_ref, out_ref):
    """General path: uw_ref/ww_ref are (3, D, D) per-gate transposed weights."""
    x = x_ref[...]
    y = jnp.maximum(y_ref[...], 0)

    rx = jnp.dot(x, uw_ref[0], preferred_element_type=jnp.float32)
    zx = jnp.dot(x, uw_ref[1], preferred_element_type=jnp.float32)
    gx = jnp.dot(x, uw_ref[2], preferred_element_type=jnp.float32)
    ry = jnp.dot(y, ww_ref[0], preferred_element_type=jnp.float32)
    zy = jnp.dot(y, ww_ref[1], preferred_element_type=jnp.float32)
    gy = jnp.dot(y, ww_ref[2], preferred_element_type=jnp.float32)

    zb = zb_ref[...].astype(jnp.float32)
    out_ref[...] = _gate_math(x, y, rx, zx, gx, ry, zy, gy, zb, out_ref.dtype)


# ----------------------------------------------------------------------------
# Parameter packing (do this ONCE at model init, not per forward call)
# ----------------------------------------------------------------------------
def pack_gru_gate_params(u_weight, w_weight, zb, *, dtype=None):
    """Pack PyTorch-layout weights for the kernel.

    u_weight / w_weight: (3*D, D) nn.Linear weights; zb: (D,).
    Returns (u_packed, w_packed, zb_packed):
      * D % 128 == 0 -> (D, 3D) wide layout (2-matmul kernel)
      * otherwise    -> (3, D, D) per-gate stacks (6-matmul kernel)
    Pass dtype=jnp.bfloat16 to keep resident weights in bf16 for bf16 models.
    """
    three_d, D = u_weight.shape
    assert three_d == 3 * D, u_weight.shape
    assert w_weight.shape == (3 * D, D), w_weight.shape
    assert zb.shape == (D,), zb.shape
    dt = jnp.dtype(dtype) if dtype is not None else jnp.dtype(u_weight.dtype)

    if D % 128 == 0:
        u_p = jnp.asarray(u_weight, dt).T                  # (D, 3D)
        w_p = jnp.asarray(w_weight, dt).T
    else:
        u_p = jnp.transpose(jnp.asarray(u_weight, dt).reshape(3, D, D), (0, 2, 1))
        w_p = jnp.transpose(jnp.asarray(w_weight, dt).reshape(3, D, D), (0, 2, 1))
    zb_p = jnp.asarray(zb, jnp.float32).reshape(1, D)
    return u_p, w_p, zb_p


# ----------------------------------------------------------------------------
# Forward wrapper
# ----------------------------------------------------------------------------
def gru_residual_gate(x, y, u_packed, w_packed, zb_packed, *, tile_n_max=1024):
    """GRUResidualGate forward. x, y: (..., D); params from pack_gru_gate_params."""
    orig_shape = x.shape
    D = x.shape[-1]
    assert y.shape == x.shape, (x.shape, y.shape)
    out_dtype = x.dtype

    wide = (u_packed.ndim == 2)
    if wide:
        assert u_packed.shape == (D, 3 * D) and w_packed.shape == (D, 3 * D)
        w_block_shape = (D, 3 * D)
        kernel = gru_gate_kernel_wide
    else:
        assert u_packed.shape == (3, D, D) and w_packed.shape == (3, D, D)
        w_block_shape = (3, D, D)
        kernel = gru_gate_kernel_stack
    assert zb_packed.shape == (1, D)

    x2 = x.reshape(-1, D)
    y2 = jnp.asarray(y, x.dtype).reshape(-1, D)
    N = x2.shape[0]

    act_bytes = jnp.dtype(x.dtype).itemsize
    w_bytes_total = int(u_packed.size + w_packed.size) * jnp.dtype(u_packed.dtype).itemsize
    zb_bytes = int(zb_packed.size) * 4

    # VMEM budget: ~85% of physical (capped at 128 MiB), used both for tile
    # sizing and as vmem_limit_bytes so the compiler never silently shrinks
    # the intended pipelining.
    cap = _vmem_capacity_bytes()
    budget = max(32 * 1024 * 1024, int(min(cap, 128 * 1024 * 1024) * 0.85))

    def run(single_buffer_invariants: bool):
        w_buffers = 1 if single_buffer_invariants else 2
        fixed = w_buffers * w_bytes_total + 2 * zb_bytes
        # Per-row cost: double-buffered x/y/out tiles + f32 intermediates
        # (gate slabs, r/z/h temporaries) that may live in VMEM.
        per_row = 3 * 2 * D * act_bytes + 10 * D * 4
        rows_fit = max(8, (budget - fixed) // per_row)
        tile_cap = max(8, min(int(tile_n_max), (int(rows_fit) // 8) * 8))

        # Balance tiles so the last one is not mostly padding.
        num_tiles = _cdiv(N, tile_cap)
        tile_n = _round_up(_cdiv(N, num_tiles), 8)
        n_pad = tile_n * num_tiles

        xp, yp = x2, y2
        if n_pad != N:
            pad = ((0, n_pad - N), (0, 0))
            xp = jnp.pad(xp, pad)
            yp = jnp.pad(yp, pad)

        def inv_spec(shape):
            imap = lambda i: (0,) * len(shape)
            if single_buffer_invariants:
                # Invariant blocks (constant index_map): never re-DMA'd, so a
                # single buffer halves their VMEM footprint.
                return pl.BlockSpec(shape, imap, pipeline_mode=pl.Buffered(1))
            return pl.BlockSpec(shape, imap)

        cost = pl.CostEstimate(
            flops=12 * n_pad * D * D,
            transcendentals=3 * n_pad * D,
            bytes_accessed=3 * n_pad * D * act_bytes + w_bytes_total + zb_bytes,
        )

        out = pl.pallas_call(
            kernel,
            out_shape=jax.ShapeDtypeStruct((n_pad, D), out_dtype),
            grid=(num_tiles,),
            in_specs=[
                pl.BlockSpec((tile_n, D), lambda i: (i, 0)),   # x row tile
                pl.BlockSpec((tile_n, D), lambda i: (i, 0)),   # relu-input row tile
                inv_spec(w_block_shape),                       # U (resident)
                inv_spec(w_block_shape),                       # W (resident)
                inv_spec((1, D)),                              # zb (resident)
            ],
            out_specs=pl.BlockSpec((tile_n, D), lambda i: (i, 0)),
            compiler_params=pltpu.CompilerParams(
                dimension_semantics=("parallel",),  # rows independent; megacore shards
                vmem_limit_bytes=int(budget),
            ),
            cost_estimate=cost,
        )(xp, yp, u_packed, w_packed, zb_packed)
        return out[:N]

    # TODO(synk): for very large d_model (resident weights >~ half of VMEM even
    # in bf16; D >= ~1536 f32 / ~2048 bf16 on v7x) add a K-tiling "arbitrary"
    # grid axis with an f32 accumulator scratch instead of whole resident weights.
    try:
        out = run(True)
    except Exception:
        # Older jax without BlockSpec(pipeline_mode=...) support: fall back to
        # default double-buffered invariants (correct, slightly more VMEM).
        out = run(False)

    return out.reshape(orig_shape)


# ----------------------------------------------------------------------------
# Demo / correctness check
# ----------------------------------------------------------------------------
def _reference(x, y, u_weight, w_weight, zb):
    yr = jnp.maximum(y, 0.0)
    ux = x @ u_weight.T
    wy = yr @ w_weight.T
    rx, zx, gx = jnp.split(ux, 3, axis=-1)
    ry, zy, gy = jnp.split(wy, 3, axis=-1)
    r = jax.nn.sigmoid(rx + ry)
    z = jax.nn.sigmoid(zx + zy - zb)
    h = jnp.tanh(gy + r * gx)
    return (1.0 - z) * x + h * yr


if __name__ == "__main__":
    # Test 1: small d_model (stack kernel path), matches the module defaults.
    d_model = 32
    seq, batch = 8, 2

    key = jax.random.PRNGKey(0)
    kx, ky, ku, kw = jax.random.split(key, 4)
    x = jax.random.normal(kx, (seq, batch, d_model), dtype=jnp.float32)
    y = jax.random.normal(ky, (seq, batch, d_model), dtype=jnp.float32)
    bound = 1.0 / (d_model ** 0.5)
    u_weight = jax.random.uniform(ku, (3 * d_model, d_model), jnp.float32, -bound, bound)
    w_weight = jax.random.uniform(kw, (3 * d_model, d_model), jnp.float32, -bound, bound)
    zb = jnp.full((d_model,), 2.0, dtype=jnp.float32)

    u_p, w_p, zb_p = pack_gru_gate_params(u_weight, w_weight, zb)  # once, at "init"
    out = jax.block_until_ready(gru_residual_gate(x, y, u_p, w_p, zb_p))
    ref = _reference(x, y, u_weight, w_weight, zb)
    assert out.shape == x.shape and out.dtype == x.dtype
    err = float(jnp.max(jnp.abs(out - ref)))
    assert jnp.allclose(out, ref, atol=1e-4, rtol=1e-4), err

    # Test 2: d_model multiple of 128 exercises the lane-aligned wide (2-matmul) path.
    d2 = 128
    k2x, k2y, k2u, k2w = jax.random.split(jax.random.PRNGKey(1), 4)
    xb = jax.random.normal(k2x, (4, 2, d2), dtype=jnp.float32)
    yb = jax.random.normal(k2y, (4, 2, d2), dtype=jnp.float32)
    b2 = 1.0 / (d2 ** 0.5)
    u2 = jax.random.uniform(k2u, (3 * d2, d2), jnp.float32, -b2, b2)
    w2 = jax.random.uniform(k2w, (3 * d2, d2), jnp.float32, -b2, b2)
    zbb = jnp.full((d2,), 2.0, dtype=jnp.float32)
    u2p, w2p, zb2p = pack_gru_gate_params(u2, w2, zbb)
    out2 = jax.block_until_ready(gru_residual_gate(xb, yb, u2p, w2p, zb2p))
    ref2 = _reference(xb, yb, u2, w2, zbb)
    assert out2.shape == xb.shape and out2.dtype == xb.dtype
    err2 = float(jnp.max(jnp.abs(out2 - ref2)))
    assert jnp.allclose(out2, ref2, atol=5e-4, rtol=5e-4), err2

    print("KERNEL_OK")
</pallas_src>

<mosaic_0001>
module attributes {stable_mosaic.version = 11 : i64} {
  func.func @gru_gate_kernel_stack(%arg0: i32, %arg1: memref<16x32xf32, #tpu.memory_space<vmem>>, %arg2: memref<16x32xf32, #tpu.memory_space<vmem>>, %arg3: memref<3x32x32xf32, #tpu.memory_space<vmem>>, %arg4: memref<3x32x32xf32, #tpu.memory_space<vmem>>, %arg5: memref<1x32xf32, #tpu.memory_space<vmem>>, %arg6: memref<16x32xf32, #tpu.memory_space<vmem>>) attributes {dimension_semantics = [#tpu.dimension_semantics<parallel>], iteration_bounds = array<i64: 1>, scalar_prefetch = 0 : i64, scratch_operands = 0 : i64, tpu.core_type = #tpu.core_type<tc>, window_params = [{transform_indices = @transform_0, window_bounds = array<i64: 16, 32>}, {transform_indices = @transform_1, window_bounds = array<i64: 16, 32>}, {pipeline_mode = #tpu.pipeline_mode<synchronous>, transform_indices = @transform_2, window_bounds = array<i64: 3, 32, 32>}, {pipeline_mode = #tpu.pipeline_mode<synchronous>, transform_indices = @transform_3, window_bounds = array<i64: 3, 32, 32>}, {pipeline_mode = #tpu.pipeline_mode<synchronous>, transform_indices = @transform_4, window_bounds = array<i64: 1, 32>}, {transform_indices = @transform_5, window_bounds = array<i64: 16, 32>}]} {
    %c0 = arith.constant 0 : index
    %c0_0 = arith.constant 0 : index
    %0 = vector.load %arg1[%c0, %c0_0] : memref<16x32xf32, #tpu.memory_space<vmem>>, vector<16x32xf32>
    %c0_1 = arith.constant 0 : index
    %c0_2 = arith.constant 0 : index
    %1 = vector.load %arg2[%c0_1, %c0_2] : memref<16x32xf32, #tpu.memory_space<vmem>>, vector<16x32xf32>
    %cst = arith.constant 0.000000e+00 : f32
    %2 = vector.broadcast %cst : f32 to vector<16x32xf32>
    %3 = arith.maximumf %1, %2 : vector<16x32xf32>
    %c0_3 = arith.constant 0 : index
    %c0_4 = arith.constant 0 : index
    %c0_5 = arith.constant 0 : index
    %4 = vector.load %arg3[%c0_3, %c0_4, %c0_5] : memref<3x32x32xf32, #tpu.memory_space<vmem>>, vector<1x32x32xf32>
    %5 = vector.shape_cast %4 : vector<1x32x32xf32> to vector<32x32xf32>
    %cst_6 = arith.constant dense<0.000000e+00> : vector<16x32xf32>
    %6 = tpu.matmul %0, %5, %cst_6 {dimension_numbers = #tpu.dot_dimension_numbers<[1], [0], [0], [1], [0, 0, 1, 1], [], []>} : vector<16x32xf32>, vector<32x32xf32>, vector<16x32xf32> -> vector<16x32xf32>
    %c1 = arith.constant 1 : index
    %c0_7 = arith.constant 0 : index
    %c0_8 = arith.constant 0 : index
    %7 = vector.load %arg3[%c1, %c0_7, %c0_8] : memref<3x32x32xf32, #tpu.memory_space<vmem>>, vector<1x32x32xf32>
    %8 = vector.shape_cast %7 : vector<1x32x32xf32> to vector<32x32xf32>
    %cst_9 = arith.constant dense<0.000000e+00> : vector<16x32xf32>
    %9 = tpu.matmul %0, %8, %cst_9 {dimension_numbers = #tpu.dot_dimension_numbers<[1], [0], [0], [1], [0, 0, 1, 1], [], []>} : vector<16x32xf32>, vector<32x32xf32>, vector<16x32xf32> -> vector<16x32xf32>
    %c2 = arith.constant 2 : index
    %c0_10 = arith.constant 0 : index
    %c0_11 = arith.constant 0 : index
    %10 = vector.load %arg3[%c2, %c0_10, %c0_11] : memref<3x32x32xf32, #tpu.memory_space<vmem>>, vector<1x32x32xf32>
    %11 = vector.shape_cast %10 : vector<1x32x32xf32> to vector<32x32xf32>
    %cst_12 = arith.constant dense<0.000000e+00> : vector<16x32xf32>
    %12 = tpu.matmul %0, %11, %cst_12 {dimension_numbers = #tpu.dot_dimension_numbers<[1], [0], [0], [1], [0, 0, 1, 1], [], []>} : vector<16x32xf32>, vector<32x32xf32>, vector<16x32xf32> -> vector<16x32xf32>
    %c0_13 = arith.constant 0 : index
    %c0_14 = arith.constant 0 : index
    %c0_15 = arith.constant 0 : index
    %13 = vector.load %arg4[%c0_13, %c0_14, %c0_15] : memref<3x32x32xf32, #tpu.memory_space<vmem>>, vector<1x32x32xf32>
    %14 = vector.shape_cast %13 : vector<1x32x32xf32> to vector<32x32xf32>
    %cst_16 = arith.constant dense<0.000000e+00> : vector<16x32xf32>
    %15 = tpu.matmul %3, %14, %cst_16 {dimension_numbers = #tpu.dot_dimension_numbers<[1], [0], [0], [1], [0, 0, 1, 1], [], []>} : vector<16x32xf32>, vector<32x32xf32>, vector<16x32xf32> -> vector<16x32xf32>
    %c1_17 = arith.constant 1 : index
    %c0_18 = arith.constant 0 : index
    %c0_19 = arith.constant 0 : index
    %16 = vector.load %arg4[%c1_17, %c0_18, %c0_19] : memref<3x32x32xf32, #tpu.memory_space<vmem>>, vector<1x32x32xf32>
    %17 = vector.shape_cast %16 : vector<1x32x32xf32> to vector<32x32xf32>
    %cst_20 = arith.constant dense<0.000000e+00> : vector<16x32xf32>
    %18 = tpu.matmul %3, %17, %cst_20 {dimension_numbers = #tpu.dot_dimension_numbers<[1], [0], [0], [1], [0, 0, 1, 1], [], []>} : vector<16x32xf32>, vector<32x32xf32>, vector<16x32xf32> -> vector<16x32xf32>
    %c2_21 = arith.constant 2 : index
    %c0_22 = arith.constant 0 : index
    %c0_23 = arith.constant 0 : index
    %19 = vector.load %arg4[%c2_21, %c0_22, %c0_23] : memref<3x32x32xf32, #tpu.memory_space<vmem>>, vector<1x32x32xf32>
    %20 = vector.shape_cast %19 : vector<1x32x32xf32> to vector<32x32xf32>
    %cst_24 = arith.constant dense<0.000000e+00> : vector<16x32xf32>
    %21 = tpu.matmul %3, %20, %cst_24 {dimension_numbers = #tpu.dot_dimension_numbers<[1], [0], [0], [1], [0, 0, 1, 1], [], []>} : vector<16x32xf32>, vector<32x32xf32>, vector<16x32xf32> -> vector<16x32xf32>
    %c0_25 = arith.constant 0 : index
    %c0_26 = arith.constant 0 : index
    %22 = vector.load %arg5[%c0_25, %c0_26] : memref<1x32xf32, #tpu.memory_space<vmem>>, vector<1x32xf32>
    %23 = arith.addf %6, %15 : vector<16x32xf32>
    %24 = arith.negf %23 : vector<16x32xf32>
    %25 = math.exp %24 : vector<16x32xf32>
    %cst_27 = arith.constant 1.000000e+00 : f32
    %26 = vector.broadcast %cst_27 : f32 to vector<16x32xf32>
    %27 = arith.addf %26, %25 : vector<16x32xf32>
    %28 = arith.divf %26, %27 : vector<16x32xf32>
    %29 = arith.addf %9, %18 : vector<16x32xf32>
    %30 = vector.broadcast %22 : vector<1x32xf32> to vector<16x32xf32>
    %31 = arith.subf %29, %30 : vector<16x32xf32>
    %32 = arith.negf %31 : vector<16x32xf32>
    %33 = math.exp %32 : vector<16x32xf32>
    %cst_28 = arith.constant 1.000000e+00 : f32
    %34 = vector.broadcast %cst_28 : f32 to vector<16x32xf32>
    %35 = arith.addf %34, %33 : vector<16x32xf32>
    %36 = arith.divf %34, %35 : vector<16x32xf32>
    %37 = arith.mulf %28, %12 : vector<16x32xf32>
    %38 = arith.addf %21, %37 : vector<16x32xf32>
    %39 = math.tanh %38 : vector<16x32xf32>
    %cst_29 = arith.constant 1.000000e+00 : f32
    %40 = vector.broadcast %cst_29 : f32 to vector<16x32xf32>
    %41 = arith.subf %40, %36 : vector<16x32xf32>
    %42 = arith.mulf %41, %0 : vector<16x32xf32>
    %43 = arith.mulf %39, %3 : vector<16x32xf32>
    %44 = arith.addf %42, %43 : vector<16x32xf32>
    %c0_30 = arith.constant 0 : index
    %c0_31 = arith.constant 0 : index
    %45 = vector.load %arg6[%c0_30, %c0_31] : memref<16x32xf32, #tpu.memory_space<vmem>>, vector<16x32xf32>
    tpu.vector_store %arg6[%c0_30, %c0_31], %44 {strides = array<i32>} : memref<16x32xf32, #tpu.memory_space<vmem>>, vector<16x32xf32>,
    return
  }
  func.func @transform_0(%arg0: i32) -> (i32, i32) {
    %c0_i32 = arith.constant 0 : i32
    %c0_i32_0 = arith.constant 0 : i32
    return %arg0, %c0_i32 : i32, i32
  }
  func.func @transform_1(%arg0: i32) -> (i32, i32) {
    %c0_i32 = arith.constant 0 : i32
    %c0_i32_0 = arith.constant 0 : i32
    return %arg0, %c0_i32 : i32, i32
  }
  func.func @transform_2(%arg0: i32) -> (i32, i32, i32) {
    %c0_i32 = arith.constant 0 : i32
    %c0_i32_0 = arith.constant 0 : i32
    %c0_i32_1 = arith.constant 0 : i32
    %c0_i32_2 = arith.constant 0 : i32
    return %c0_i32, %c0_i32_0, %c0_i32_1 : i32, i32, i32
  }
  func.func @transform_3(%arg0: i32) -> (i32, i32, i32) {
    %c0_i32 = arith.constant 0 : i32
    %c0_i32_0 = arith.constant 0 : i32
    %c0_i32_1 = arith.constant 0 : i32
    %c0_i32_2 = arith.constant 0 : i32
    return %c0_i32, %c0_i32_0, %c0_i32_1 : i32, i32, i32
  }
  func.func @transform_4(%arg0: i32) -> (i32, i32) {
    %c0_i32 = arith.constant 0 : i32
    %c0_i32_0 = arith.constant 0 : i32
    %c0_i32_1 = arith.constant 0 : i32
    return %c0_i32, %c0_i32_0 : i32, i32
  }
  func.func @transform_5(%arg0: i32) -> (i32, i32) {
    %c0_i32 = arith.constant 0 : i32
    %c0_i32_0 = arith.constant 0 : i32
    return %arg0, %c0_i32 : i32, i32
  }
}

module attributes {stable_mosaic.version = 11 : i64} {
  func.func @gru_gate_kernel_stack(%arg0: i32, %arg1: memref<16x32xf32, #tpu.memory_space<vmem>>, %arg2: memref<16x32xf32, #tpu.memory_space<vmem>>, %arg3: memref<3x32x32xf32, #tpu.memory_space<vmem>>, %arg4: memref<3x32x32xf32, #tpu.memory_space<vmem>>, %arg5: memref<1x32xf32, #tpu.memory_space<vmem>>, %arg6: memref<16x32xf32, #tpu.memory_space<vmem>>) attributes {dimension_semantics = [#tpu.dimension_semantics<parallel>], iteration_bounds = array<i64: 1>, scalar_prefetch = 0 : i64, scratch_operands = 0 : i64, tpu.core_type = #tpu.core_type<tc>, window_params = [{transform_indices = @transform_0, window_bounds = array<i64: 16, 32>}, {transform_indices = @transform_1, window_bounds = array<i64: 16, 32>}, {pipeline_mode = #tpu.pipeline_mode<synchronous>, transform_indices = @transform_2, window_bounds = array<i64: 3, 32, 32>}, {pipeline_mode = #tpu.pipeline_mode<synchronous>, transform_indices = @transform_3, window_bounds = array<i64: 3, 32, 32>}, {pipeline_mode = #tpu.pipeline_mode<synchronous>, transform_indices = @transform_4, window_bounds = array<i64: 1, 32>}, {transform_indices = @transform_5, window_bounds = array<i64: 16, 32>}]} {
    %c0 = arith.constant 0 : index
    %c0_0 = arith.constant 0 : index
    %0 = vector.load %arg1[%c0, %c0_0] : memref<16x32xf32, #tpu.memory_space<vmem>>, vector<16x32xf32>
    %c0_1 = arith.constant 0 : index
    %c0_2 = arith.constant 0 : index
    %1 = vector.load %arg2[%c0_1, %c0_2] : memref<16x32xf32, #tpu.memory_space<vmem>>, vector<16x32xf32>
    %cst = arith.constant 0.000000e+00 : f32
    %2 = vector.broadcast %cst : f32 to vector<16x32xf32>
    %3 = arith.maximumf %1, %2 : vector<16x32xf32>
    %c0_3 = arith.constant 0 : index
    %c0_4 = arith.constant 0 : index
    %c0_5 = arith.constant 0 : index
    %4 = vector.load %arg3[%c0_3, %c0_4, %c0_5] : memref<3x32x32xf32, #tpu.memory_space<vmem>>, vector<1x32x32xf32>
    %5 = vector.shape_cast %4 : vector<1x32x32xf32> to vector<32x32xf32>
    %cst_6 = arith.constant dense<0.000000e+00> : vector<16x32xf32>
    %6 = tpu.matmul %0, %5, %cst_6 {dimension_numbers = #tpu.dot_dimension_numbers<[1], [0], [0], [1], [0, 0, 1, 1], [], []>} : vector<16x32xf32>, vector<32x32xf32>, vector<16x32xf32> -> vector<16x32xf32>
    %c1 = arith.constant 1 : index
    %c0_7 = arith.constant 0 : index
    %c0_8 = arith.constant 0 : index
    %7 = vector.load %arg3[%c1, %c0_7, %c0_8] : memref<3x32x32xf32, #tpu.memory_space<vmem>>, vector<1x32x32xf32>
    %8 = vector.shape_cast %7 : vector<1x32x32xf32> to vector<32x32xf32>
    %cst_9 = arith.constant dense<0.000000e+00> : vector<16x32xf32>
    %9 = tpu.matmul %0, %8, %cst_9 {dimension_numbers = #tpu.dot_dimension_numbers<[1], [0], [0], [1], [0, 0, 1, 1], [], []>} : vector<16x32xf32>, vector<32x32xf32>, vector<16x32xf32> -> vector<16x32xf32>
    %c2 = arith.constant 2 : index
    %c0_10 = arith.constant 0 : index
    %c0_11 = arith.constant 0 : index
    %10 = vector.load %arg3[%c2, %c0_10, %c0_11] : memref<3x32x32xf32, #tpu.memory_space<vmem>>, vector<1x32x32xf32>
    %11 = vector.shape_cast %10 : vector<1x32x32xf32> to vector<32x32xf32>
    %cst_12 = arith.constant dense<0.000000e+00> : vector<16x32xf32>
    %12 = tpu.matmul %0, %11, %cst_12 {dimension_numbers = #tpu.dot_dimension_numbers<[1], [0], [0], [1], [0, 0, 1, 1], [], []>} : vector<16x32xf32>, vector<32x32xf32>, vector<16x32xf32> -> vector<16x32xf32>
    %c0_13 = arith.constant 0 : index
    %c0_14 = arith.constant 0 : index
    %c0_15 = arith.constant 0 : index
    %13 = vector.load %arg4[%c0_13, %c0_14, %c0_15] : memref<3x32x32xf32, #tpu.memory_space<vmem>>, vector<1x32x32xf32>
    %14 = vector.shape_cast %13 : vector<1x32x32xf32> to vector<32x32xf32>
    %cst_16 = arith.constant dense<0.000000e+00> : vector<16x32xf32>
    %15 = tpu.matmul %3, %14, %cst_16 {dimension_numbers = #tpu.dot_dimension_numbers<[1], [0], [0], [1], [0, 0, 1, 1], [], []>} : vector<16x32xf32>, vector<32x32xf32>, vector<16x32xf32> -> vector<16x32xf32>
    %c1_17 = arith.constant 1 : index
    %c0_18 = arith.constant 0 : index
    %c0_19 = arith.constant 0 : index
    %16 = vector.load %arg4[%c1_17, %c0_18, %c0_19] : memref<3x32x32xf32, #tpu.memory_space<vmem>>, vector<1x32x32xf32>
    %17 = vector.shape_cast %16 : vector<1x32x32xf32> to vector<32x32xf32>
    %cst_20 = arith.constant dense<0.000000e+00> : vector<16x32xf32>
    %18 = tpu.matmul %3, %17, %cst_20 {dimension_numbers = #tpu.dot_dimension_numbers<[1], [0], [0], [1], [0, 0, 1, 1], [], []>} : vector<16x32xf32>, vector<32x32xf32>, vector<16x32xf32> -> vector<16x32xf32>
    %c2_21 = arith.constant 2 : index
    %c0_22 = arith.constant 0 : index
    %c0_23 = arith.constant 0 : index
    %19 = vector.load %arg4[%c2_21, %c0_22, %c0_23] : memref<3x32x32xf32, #tpu.memory_space<vmem>>, vector<1x32x32xf32>
    %20 = vector.shape_cast %19 : vector<1x32x32xf32> to vector<32x32xf32>
    %cst_24 = arith.constant dense<0.000000e+00> : vector<16x32xf32>
    %21 = tpu.matmul %3, %20, %cst_24 {dimension_numbers = #tpu.dot_dimension_numbers<[1], [0], [0], [1], [0, 0, 1, 1], [], []>} : vector<16x32xf32>, vector<32x32xf32>, vector<16x32xf32> -> vector<16x32xf32>
    %c0_25 = arith.constant 0 : index
    %c0_26 = arith.constant 0 : index
    %22 = vector.load %arg5[%c0_25, %c0_26] : memref<1x32xf32, #tpu.memory_space<vmem>>, vector<1x32xf32>
    %23 = arith.addf %6, %15 : vector<16x32xf32>
    %24 = arith.negf %23 : vector<16x32xf32>
    %25 = math.exp %24 : vector<16x32xf32>
    %cst_27 = arith.constant 1.000000e+00 : f32
    %26 = vector.broadcast %cst_27 : f32 to vector<16x32xf32>
    %27 = arith.addf %26, %25 : vector<16x32xf32>
    %28 = arith.divf %26, %27 : vector<16x32xf32>
    %29 = arith.addf %9, %18 : vector<16x32xf32>
    %30 = vector.broadcast %22 : vector<1x32xf32> to vector<16x32xf32>
    %31 = arith.subf %29, %30 : vector<16x32xf32>
    %32 = arith.negf %31 : vector<16x32xf32>
    %33 = math.exp %32 : vector<16x32xf32>
    %cst_28 = arith.constant 1.000000e+00 : f32
    %34 = vector.broadcast %cst_28 : f32 to vector<16x32xf32>
    %35 = arith.addf %34, %33 : vector<16x32xf32>
    %36 = arith.divf %34, %35 : vector<16x32xf32>
    %37 = arith.mulf %28, %12 : vector<16x32xf32>
    %38 = arith.addf %21, %37 : vector<16x32xf32>
    %39 = math.tanh %38 : vector<16x32xf32>
    %cst_29 = arith.constant 1.000000e+00 : f32
    %40 = vector.broadcast %cst_29 : f32 to vector<16x32xf32>
    %41 = arith.subf %40, %36 : vector<16x32xf32>
    %42 = arith.mulf %41, %0 : vector<16x32xf32>
    %43 = arith.mulf %39, %3 : vector<16x32xf32>
    %44 = arith.addf %42, %43 : vector<16x32xf32>
    %c0_30 = arith.constant 0 : index
    %c0_31 = arith.constant 0 : index
    %45 = vector.load %arg6[%c0_30, %c0_31] : memref<16x32xf32, #tpu.memory_space<vmem>>, vector<16x32xf32>
    tpu.vector_store %arg6[%c0_30, %c0_31], %44 {strides = array<i32>} : memref<16x32xf32, #tpu.memory_space<vmem>>, vector<16x32xf32>,
    return
  }
  func.func @transform_0(%arg0: i32) -> (i32, i32) {
    %c0_i32 = arith.constant 0 : i32
    %c0_i32_0 = arith.constant 0 : i32
    return %arg0, %c0_i32 : i32, i32
  }
  func.func @transform_1(%arg0: i32) -> (i32, i32) {
    %c0_i32 = arith.constant 0 : i32
    %c0_i32_0 = arith.constant 0 : i32
    return %arg0, %c0_i32 : i32, i32
  }
  func.func @transform_2(%arg0: i32) -> (i32, i32, i32) {
    %c0_i32 = arith.constant 0 : i32
    %c0_i32_0 = arith.constant 0 : i32
    %c0_i32_1 = arith.constant 0 : i32
    %c0_i32_2 = arith.constant 0 : i32
    return %c0_i32, %c0_i32_0, %c0_i32_1 : i32, i32, i32
  }
  func.func @transform_3(%arg0: i32) -> (i32, i32, i32) {
    %c0_i32 = arith.constant 0 : i32
    %c0_i32_0 = arith.constant 0 : i32
    %c0_i32_1 = arith.constant 0 : i32
    %c0_i32_2 = arith.constant 0 : i32
    return %c0_i32, %c0_i32_0, %c0_i32_1 : i32, i32, i32
  }
  func.func @transform_4(%arg0: i32) -> (i32, i32) {
    %c0_i32 = arith.constant 0 : i32
    %c0_i32_0 = arith.constant 0 : i32
    %c0_i32_1 = arith.constant 0 : i32
    return %c0_i32, %c0_i32_0 : i32, i32
  }
  func.func @transform_5(%arg0: i32) -> (i32, i32) {
    %c0_i32 = arith.constant 0 : i32
    %c0_i32_0 = arith.constant 0 : i32
    return %arg0, %c0_i32 : i32, i32
  }
}

</mosaic_0001>

<llo_original>
// kernel: tpu_custom_call.1
$region0: #{tpu_custom_call.1}
  #allocation0 [shape = 'u32[]', space=smem, size = 0x4, offset = 0x4, fixed_abs, tag = 'smem constant byte address 0x4 - core index']
  #allocation1 [shape = 'u32[144,128]{1,0:T(1,128)}', space=vmem, size = 0x12000, scoped, tag = 'internal scratch']
  %s0 = inlined_call_operand.hbm [shape: f32[16,32], index: 0, kind: input, shape index: {}]
  %s1 = inlined_call_operand.hbm [shape: f32[16,32], index: 1, kind: input, shape index: {}]
  %s2 = inlined_call_operand.hbm [shape: f32[3,32,32], index: 2, kind: input, shape index: {}]
  %s3 = inlined_call_operand.hbm [shape: f32[3,32,32], index: 3, kind: input, shape index: {}]
  %s4 = inlined_call_operand.vmem [shape: f32[1,32], index: 4, kind: input, shape index: {}]
  %s5 = inlined_call_operand.hbm [shape: f32[16,32], index: 5, kind: output, shape index: {}]
  %s6 = sld [smem:[#allocation0]]
  $region46: #{tpu_custom_call.1} parent=0
    _
  %s8 = ssub.s32 1, %s6
  %s9 = scalar_select 0, %s8, %s6
  $region1: #{tpu_custom_call.1} parent=0
    #allocation2 [shape = 'u8[8192]{0}', space=vmem, size = 0x2000, scoped, tag = 'input window, operand 0, single buffered']
    #allocation3 [shape = 's32[1]{0}', space=sflag, size = 0x4, scoped, tag = 'scoped memory for tpu_custom_call.1']
    #allocation4 [shape = 's32[1]{0}', space=sflag, size = 0x4, scoped, tag = 'scoped memory for tpu_custom_call.1']
    #allocation5 [shape = 'u8[8192]{0}', space=vmem, size = 0x2000, scoped, tag = 'input window, operand 1, single buffered']
    #allocation6 [shape = 's32[1]{0}', space=sflag, size = 0x4, scoped, tag = 'scoped memory for tpu_custom_call.1']
    #allocation7 [shape = 'u8[49152]{0}', space=vmem, size = 0xc000, scoped, tag = 'input window, operand 2, single buffered']
    #allocation8 [shape = 'u8[49152]{0}', space=vmem, size = 0xc000, scoped, tag = 'input window, operand 3, single buffered']
    #allocation9 [shape = 's32[1]{0}', space=sflag, size = 0x4, scoped, tag = 'scoped memory for tpu_custom_call.1']
    #allocation10 [shape = 'u8[8192]{0}', space=vmem, size = 0x2000, scoped, tag = 'output window, operand 0, single buffered']
    %10 = vsyncpa [#allocation3], 0
    %11 = vsyncpa [#allocation6], 0
    %12 = vsyncpa [#allocation9], 0
    %13 = vsyncpa [#allocation4], 0
    // Predicated region
    $region2: #{tpu_custom_call.1} parent=1 // pred_check
      _
    $region3: #{tpu_custom_call.1} parent=1 // pred_check_branch
      %15 = sbr.rel (0) target = $region5
    $region4: #{tpu_custom_call.1} parent=1 // pred_region
      %s17 = ssub.s32 256, 256
      %18 = vsyncadd [#allocation3], %s17
      %s19 = sshll.u32 [#allocation2], 4
      %s20 = int_to_ptr.vmem [resolvable:$true] %s19
      %25 = dma.hbm_to_vmem [thread:$0]  %s0, 256, %s20, [#allocation3], 128, 128, 8
    $region5: #{tpu_custom_call.1} parent=1 // pred_fallthru
      _
    // Predicated region
    $region6: #{tpu_custom_call.1} parent=1 // pred_check
      _
    $region7: #{tpu_custom_call.1} parent=1 // pred_check_branch
      %27 = sbr.rel (0) target = $region9
    $region8: #{tpu_custom_call.1} parent=1 // pred_region
      %s29 = ssub.s32 256, 256
      %30 = vsyncadd [#allocation6], %s29
      %s31 = sshll.u32 [#allocation5], 4
      %s32 = int_to_ptr.vmem [resolvable:$true] %s31
      %37 = dma.hbm_to_vmem [thread:$0]  %s1, 256, %s32, [#allocation6], 128, 128, 8
    $region9: #{tpu_custom_call.1} parent=1 // pred_fallthru
      _
    // Predicated region
    $region10: #{tpu_custom_call.1} parent=1 // pred_check
      _
    $region11: #{tpu_custom_call.1} parent=1 // pred_check_branch
      %39 = sbr.rel (0) target = $region13
    $region12: #{tpu_custom_call.1} parent=1 // pred_region
      %s41 = ssub.s32 1536, 1536
      %42 = vsyncadd [#allocation6], %s41
      %s43 = sshll.u32 [#allocation7], 4
      %s44 = int_to_ptr.vmem [resolvable:$true] %s43
      %49 = dma.hbm_to_vmem [thread:$0]  %s2, 1536, %s44, [#allocation6], 128, 128, 8
    $region13: #{tpu_custom_call.1} parent=1 // pred_fallthru
      _
    // Predicated region
    $region14: #{tpu_custom_call.1} parent=1 // pred_check
      _
    $region15: #{tpu_custom_call.1} parent=1 // pred_check_branch
      %51 = sbr.rel (0) target = $region17
    $region16: #{tpu_custom_call.1} parent=1 // pred_region
      %s53 = ssub.s32 1536, 1536
      %54 = vsyncadd [#allocation9], %s53
      %s55 = sshll.u32 [#allocation8], 4
      %s56 = int_to_ptr.vmem [resolvable:$true] %s55
      %61 = dma.hbm_to_vmem [thread:$0]  %s3, 1536, %s56, [#allocation9], 128, 128, 8
    $region17: #{tpu_custom_call.1} parent=1 // pred_fallthru
      _
    // Predicated region
    $region18: #{tpu_custom_call.1} parent=1 // pred_check
      _
    $region19: #{tpu_custom_call.1} parent=1 // pred_check_branch
      %63 = sbr.rel (0) target = $region21
    $region20: #{tpu_custom_call.1} parent=1 // pred_region
      _
    $region21: #{tpu_custom_call.1} parent=1 // pred_fallthru
      _
    // Predicated region
    $region22: #{tpu_custom_call.1} parent=1 // pred_check
      _
    $region23: #{tpu_custom_call.1} parent=1 // pred_check_branch
      %65 = sbr.rel (0) target = $region25
    $region24: #{tpu_custom_call.1} parent=1 // pred_region
      %66 = dma.done [#allocation3], 256
    $region25: #{tpu_custom_call.1} parent=1 // pred_fallthru
      _
    // Predicated region
    $region26: #{tpu_custom_call.1} parent=1 // pred_check
      _
    $region27: #{tpu_custom_call.1} parent=1 // pred_check_branch
      %68 = sbr.rel (0) target = $region29
    $region28: #{tpu_custom_call.1} parent=1 // pred_region
      %69 = dma.done [#allocation6], 256
    $region29: #{tpu_custom_call.1} parent=1 // pred_fallthru
      _
    // Predicated region
    $region30: #{tpu_custom_call.1} parent=1 // pred_check
      _
    $region31: #{tpu_custom_call.1} parent=1 // pred_check_branch
      %71 = sbr.rel (0) target = $region33
    $region32: #{tpu_custom_call.1} parent=1 // pred_region
      %72 = dma.done [#allocation6], 1536
    $region33: #{tpu_custom_call.1} parent=1 // pred_fallthru
      _
    // Predicated region
    $region34: #{tpu_custom_call.1} parent=1 // pred_check
      _
    $region35: #{tpu_custom_call.1} parent=1 // pred_check_branch
      %74 = sbr.rel (0) target = $region37
    $region36: #{tpu_custom_call.1} parent=1 // pred_region
      %75 = dma.done [#allocation9], 1536
    $region37: #{tpu_custom_call.1} parent=1 // pred_fallthru
      _
    %v76 = vld [vmem:[#allocation2] sm:$0xff]
    %v77 = vld [vmem:[#allocation2 + $0x8] sm:$0xff]
    %v78 = vld [vmem:[#allocation5] sm:$0xff]
    %v79 = vld [vmem:[#allocation5 + $0x8] sm:$0xff]
    %v80 = vmax.f32 %v78, 0.0
    %v81 = vmax.f32 %v79, 0.0
    %v82 = vld [vmem:[#allocation7] sm:$0xff]
    %v83 = vld [vmem:[#allocation7 + $0x8] sm:$0xff]
    %v84 = vld [vmem:[#allocation7 + $0x10] sm:$0xff]
    %v85 = vld [vmem:[#allocation7 + $0x18] sm:$0xff]
    %s86 = scalar_lea.vmem [#allocation7], 32
    %v87 = vld [vmem:[%s86] sm:$0xff]
    %v88 = vld [vmem:[%s86 + $0x8] sm:$0xff]
    %v89 = vld [vmem:[%s86 + $0x10] sm:$0xff]
    %v90 = vld [vmem:[%s86 + $0x18] sm:$0xff]
    %s91 = scalar_lea.vmem [#allocation7], 64
    %v92 = vld [vmem:[%s91] sm:$0xff]
    %v93 = vld [vmem:[%s91 + $0x8] sm:$0xff]
    %v94 = vld [vmem:[%s91 + $0x10] sm:$0xff]
    %v95 = vld [vmem:[%s91 + $0x18] sm:$0xff]
    %vm96 = vcmask 261120
    %v98 = vsel %vm96, %v76, 0
    %v101 = vsel %vm96, %v77, 0
    %103 = vmatprep.subr.mxu0 0.0
    %104 = vmatpush1.msra.mxu0 0.0
    %105 = vmatprep.subr.mxu0 0.0
    %106 = vmatpush1.msra.mxu0 0.0
    %107 = vmatprep.subr.mxu0 0.0
    %108 = vmatpush1.msra.mxu0 0.0
    %109 = vmatprep.subr.mxu0 0.0
    %110 = vmatpush1.msra.mxu0 0.0
    %111 = vmatprep.subr.mxu0 0.0
    %112 = vmatpush1.msra.mxu0 0.0
    %113 = vmatprep.subr.mxu0 0.0
    %114 = vmatpush1.msra.mxu0 0.0
    %115 = vmatprep.subr.mxu0 0.0
    %116 = vmatpush1.msra.mxu0 0.0
    %117 = vmatprep.subr.mxu0 0.0
    %118 = vmatpush1.msra.mxu0 0.0
    %119 = vmatprep.subr.mxu0 0.0
    %120 = vmatpush1.msra.mxu0 0.0
    %121 = vmatprep.subr.mxu0 0.0
    %122 = vmatpush1.msra.mxu0 0.0
    %123 = vmatprep.subr.mxu0 0.0
    %124 = vmatpush1.msra.mxu0 0.0
    %125 = vmatprep.subr.mxu0 0.0
    %126 = vmatpush1.msra.mxu0 0.0
    %127 = vmatprep.subr.mxu0 0.0
    %128 = vmatpush1.msra.mxu0 %v95
    %129 = vmatprep.subr.mxu0 0.0
    %130 = vmatpush1.msra.mxu0 %v94
    %131 = vmatprep.subr.mxu0 0.0
    %132 = vmatpush1.msra.mxu0 %v93
    %133 = vmatprep.subr.mxu0 0.0
    %134 = vmatpush1.msra.mxu0 %v92
    %135 = vmatprep.subr.mxu0 0.0
    %136 = vmatpush2.msra.mxu0 0.0
    %137 = vmatprep.subr.mxu0 0.0
    %138 = vmatpush2.msra.mxu0 0.0
    %139 = vmatprep.subr.mxu0 0.0
    %140 = vmatpush2.msra.mxu0 0.0
    %141 = vmatprep.subr.mxu0 0.0
    %142 = vmatpush2.msra.mxu0 0.0
    %143 = vmatprep.subr.mxu0 0.0
    %144 = vmatpush2.msra.mxu0 0.0
    %145 = vmatprep.subr.mxu0 0.0
    %146 = vmatpush2.msra.mxu0 0.0
    %147 = vmatprep.subr.mxu0 0.0
    %148 = vmatpush2.msra.mxu0 0.0
    %149 = vmatprep.subr.mxu0 0.0
    %150 = vmatpush2.msra.mxu0 0.0
    %151 = vmatprep.subr.mxu0 0.0
    %152 = vmatpush2.msra.mxu0 0.0
    %153 = vmatprep.subr.mxu0 0.0
    %154 = vmatpush2.msra.mxu0 0.0
    %155 = vmatprep.subr.mxu0 0.0
    %156 = vmatpush2.msra.mxu0 0.0
    %157 = vmatprep.subr.mxu0 0.0
    %158 = vmatpush2.msra.mxu0 0.0
    %159 = vmatprep.subr.mxu0 0.0
    %160 = vmatpush2.msra.mxu0 0.0
    %161 = vmatprep.subr.mxu0 0.0
    %162 = vmatpush2.msra.mxu0 0.0
    %163 = vmatprep.subr.mxu0 0.0
    %164 = vmatpush2.msra.mxu0 0.0
    %165 = vmatprep.subr.mxu0 0.0
    %166 = vmatpush2.msra.mxu0 0.0
    %167 = vmatprep.mubr.f32.mxu0 0.0
    %168 = vmatmul.mubr.f32.gmra.mxu0 %v98
    %v169 = vpop.f32.mrf.mxu0
    %v170 = vadd.f32 0.0, %v169
    %v171 = vpop.f32.mrf.mxu0
    %172 = vmatprep.mubr.f32.mxu0 0.0
    %173 = vmatmul.mubr.f32.gmra.mxu0 %v101
    %v174 = vpop.f32.mrf.mxu0
    %v175 = vadd.f32 0.0, %v174
    %v176 = vpop.f32.mrf.mxu0
    %177 = vdwg.mxu0
    %v178 = vld [vmem:[#allocation8] sm:$0xff]
    %v179 = vld [vmem:[#allocation8 + $0x8] sm:$0xff]
    %v180 = vld [vmem:[#allocation8 + $0x10] sm:$0xff]
    %v181 = vld [vmem:[#allocation8 + $0x18] sm:$0xff]
    %v183 = vsel %vm96, %v80, 0
    %v186 = vsel %vm96, %v81, 0
    %188 = vmatprep.subr.mxu0 0.0
    %189 = vmatpush1.msra.mxu0 0.0
    %190 = vmatprep.subr.mxu0 0.0
    %191 = vmatpush1.msra.mxu0 0.0
    %192 = vmatprep.subr.mxu0 0.0
    %193 = vmatpush1.msra.mxu0 0.0
    %194 = vmatprep.subr.mxu0 0.0
    %195 = vmatpush1.msra.mxu0 0.0
    %196 = vmatprep.subr.mxu0 0.0
    %197 = vmatpush1.msra.mxu0 0.0
    %198 = vmatprep.subr.mxu0 0.0
    %199 = vmatpush1.msra.mxu0 0.0
    %200 = vmatprep.subr.mxu0 0.0
    %201 = vmatpush1.msra.mxu0 0.0
    %202 = vmatprep.subr.mxu0 0.0
    %203 = vmatpush1.msra.mxu0 0.0
    %204 = vmatprep.subr.mxu0 0.0
    %205 = vmatpush1.msra.mxu0 0.0
    %206 = vmatprep.subr.mxu0 0.0
    %207 = vmatpush1.msra.mxu0 0.0
    %208 = vmatprep.subr.mxu0 0.0
    %209 = vmatpush1.msra.mxu0 0.0
    %210 = vmatprep.subr.mxu0 0.0
    %211 = vmatpush1.msra.mxu0 0.0
    %212 = vmatprep.subr.mxu0 0.0
    %213 = vmatpush1.msra.mxu0 %v181
    %214 = vmatprep.subr.mxu0 0.0
    %215 = vmatpush1.msra.mxu0 %v180
    %216 = vmatprep.subr.mxu0 0.0
    %217 = vmatpush1.msra.mxu0 %v179
    %218 = vmatprep.subr.mxu0 0.0
    %219 = vmatpush1.msra.mxu0 %v178
    %220 = vmatprep.subr.mxu0 0.0
    %221 = vmatpush2.msra.mxu0 0.0
    %222 = vmatprep.subr.mxu0 0.0
    %223 = vmatpush2.msra.mxu0 0.0
    %224 = vmatprep.subr.mxu0 0.0
    %225 = vmatpush2.msra.mxu0 0.0
    %226 = vmatprep.subr.mxu0 0.0
    %227 = vmatpush2.msra.mxu0 0.0
    %228 = vmatprep.subr.mxu0 0.0
    %229 = vmatpush2.msra.mxu0 0.0
    %230 = vmatprep.subr.mxu0 0.0
    %231 = vmatpush2.msra.mxu0 0.0
    %232 = vmatprep.subr.mxu0 0.0
    %233 = vmatpush2.msra.mxu0 0.0
    %234 = vmatprep.subr.mxu0 0.0
    %235 = vmatpush2.msra.mxu0 0.0
    %236 = vmatprep.subr.mxu0 0.0
    %237 = vmatpush2.msra.mxu0 0.0
    %238 = vmatprep.subr.mxu0 0.0
    %239 = vmatpush2.msra.mxu0 0.0
    %240 = vmatprep.subr.mxu0 0.0
    %241 = vmatpush2.msra.mxu0 0.0
    %242 = vmatprep.subr.mxu0 0.0
    %243 = vmatpush2.msra.mxu0 0.0
    %244 = vmatprep.subr.mxu0 0.0
    %245 = vmatpush2.msra.mxu0 0.0
    %246 = vmatprep.subr.mxu0 0.0
    %247 = vmatpush2.msra.mxu0 0.0
    %248 = vmatprep.subr.mxu0 0.0
    %249 = vmatpush2.msra.mxu0 0.0
    %250 = vmatprep.subr.mxu0 0.0
    %251 = vmatpush2.msra.mxu0 0.0
    %252 = vmatprep.mubr.f32.mxu0 0.0
    %253 = vmatmul.mubr.f32.gmra.mxu0 %v183
    %v254 = vpop.f32.mrf.mxu0
    %v255 = vadd.f32 0.0, %v254
    %v256 = vpop.f32.mrf.mxu0
    %257 = vmatprep.mubr.f32.mxu0 0.0
    %258 = vmatmul.mubr.f32.gmra.mxu0 %v186
    %v259 = vpop.f32.mrf.mxu0
    %v260 = vadd.f32 0.0, %v259
    %v261 = vpop.f32.mrf.mxu0
    %262 = vdwg.mxu0
    %s263 = scalar_lea.vmem [#allocation8], 32
    %v264 = vld [vmem:[%s263] sm:$0xff]
    %v265 = vld [vmem:[%s263 + $0x8] sm:$0xff]
    %v266 = vld [vmem:[%s263 + $0x10] sm:$0xff]
    %v267 = vld [vmem:[%s263 + $0x18] sm:$0xff]
    %268 = vmatprep.subr.mxu0 0.0
    %269 = vmatpush1.msra.mxu0 0.0
    %270 = vmatprep.subr.mxu0 0.0
    %271 = vmatpush1.msra.mxu0 0.0
    %272 = vmatprep.subr.mxu0 0.0
    %273 = vmatpush1.msra.mxu0 0.0
    %274 = vmatprep.subr.mxu0 0.0
    %275 = vmatpush1.msra.mxu0 0.0
    %276 = vmatprep.subr.mxu0 0.0
    %277 = vmatpush1.msra.mxu0 0.0
    %278 = vmatprep.subr.mxu0 0.0
    %279 = vmatpush1.msra.mxu0 0.0
    %280 = vmatprep.subr.mxu0 0.0
    %281 = vmatpush1.msra.mxu0 0.0
    %282 = vmatprep.subr.mxu0 0.0
    %283 = vmatpush1.msra.mxu0 0.0
    %284 = vmatprep.subr.mxu0 0.0
    %285 = vmatpush1.msra.mxu0 0.0
    %286 = vmatprep.subr.mxu0 0.0
    %287 = vmatpush1.msra.mxu0 0.0
    %288 = vmatprep.subr.mxu0 0.0
    %289 = vmatpush1.msra.mxu0 0.0
    %290 = vmatprep.subr.mxu0 0.0
    %291 = vmatpush1.msra.mxu0 0.0
    %292 = vmatprep.subr.mxu0 0.0
    %293 = vmatpush1.msra.mxu0 %v267
    %294 = vmatprep.subr.mxu0 0.0
    %295 = vmatpush1.msra.mxu0 %v266
    %296 = vmatprep.subr.mxu0 0.0
    %297 = vmatpush1.msra.mxu0 %v265
    %298 = vmatprep.subr.mxu0 0.0
    %299 = vmatpush1.msra.mxu0 %v264
    %300 = vmatprep.subr.mxu0 0.0
    %301 = vmatpush2.msra.mxu0 0.0
    %302 = vmatprep.subr.mxu0 0.0
    %303 = vmatpush2.msra.mxu0 0.0
    %304 = vmatprep.subr.mxu0 0.0
    %305 = vmatpush2.msra.mxu0 0.0
    %306 = vmatprep.subr.mxu0 0.0
    %307 = vmatpush2.msra.mxu0 0.0
    %308 = vmatprep.subr.mxu0 0.0
    %309 = vmatpush2.msra.mxu0 0.0
    %310 = vmatprep.subr.mxu0 0.0
    %311 = vmatpush2.msra.mxu0 0.0
    %312 = vmatprep.subr.mxu0 0.0
    %313 = vmatpush2.msra.mxu0 0.0
    %314 = vmatprep.subr.mxu0 0.0
    %315 = vmatpush2.msra.mxu0 0.0
    %316 = vmatprep.subr.mxu0 0.0
    %317 = vmatpush2.msra.mxu0 0.0
    %318 = vmatprep.subr.mxu0 0.0
    %319 = vmatpush2.msra.mxu0 0.0
    %320 = vmatprep.subr.mxu0 0.0
    %321 = vmatpush2.msra.mxu0 0.0
    %322 = vmatprep.subr.mxu0 0.0
    %323 = vmatpush2.msra.mxu0 0.0
    %324 = vmatprep.subr.mxu0 0.0
    %325 = vmatpush2.msra.mxu0 0.0
    %326 = vmatprep.subr.mxu0 0.0
    %327 = vmatpush2.msra.mxu0 0.0
    %328 = vmatprep.subr.mxu0 0.0
    %329 = vmatpush2.msra.mxu0 0.0
    %330 = vmatprep.subr.mxu0 0.0
    %331 = vmatpush2.msra.mxu0 0.0
    %332 = vmatprep.mubr.f32.mxu0 0.0
    %333 = vmatmul.mubr.f32.gmra.mxu0 %v183
    %v334 = vpop.f32.mrf.mxu0
    %v335 = vadd.f32 0.0, %v334
    %v336 = vpop.f32.mrf.mxu0
    %337 = vmatprep.mubr.f32.mxu0 0.0
    %338 = vmatmul.mubr.f32.gmra.mxu0 %v186
    %v339 = vpop.f32.mrf.mxu0
    %v340 = vadd.f32 0.0, %v339
    %v341 = vpop.f32.mrf.mxu0
    %342 = vdwg.mxu0
    %s343 = scalar_lea.vmem [#allocation8], 64
    %v344 = vld [vmem:[%s343] sm:$0xff]
    %v345 = vld [vmem:[%s343 + $0x8] sm:$0xff]
    %v346 = vld [vmem:[%s343 + $0x10] sm:$0xff]
    %v347 = vld [vmem:[%s343 + $0x18] sm:$0xff]
    %v348 = vld [vmem:[%s4] sm:$0x1]
    %349 = vmatprep.subr.mxu0 0.0
    %350 = vmatpush1.msra.mxu0 0.0
    %351 = vmatprep.subr.mxu0 0.0
    %352 = vmatpush1.msra.mxu0 0.0
    %353 = vmatprep.subr.mxu0 0.0
    %354 = vmatpush1.msra.mxu0 0.0
    %355 = vmatprep.subr.mxu0 0.0
    %356 = vmatpush1.msra.mxu0 0.0
    %357 = vmatprep.subr.mxu0 0.0
    %358 = vmatpush1.msra.mxu0 0.0
    %359 = vmatprep.subr.mxu0 0.0
    %360 = vmatpush1.msra.mxu0 0.0
    %361 = vmatprep.subr.mxu0 0.0
    %362 = vmatpush1.msra.mxu0 0.0
    %363 = vmatprep.subr.mxu0 0.0
    %364 = vmatpush1.msra.mxu0 0.0
    %365 = vmatprep.subr.mxu0 0.0
    %366 = vmatpush1.msra.mxu0 0.0
    %367 = vmatprep.subr.mxu0 0.0
    %368 = vmatpush1.msra.mxu0 0.0
    %369 = vmatprep.subr.mxu0 0.0
    %370 = vmatpush1.msra.mxu0 0.0
    %371 = vmatprep.subr.mxu0 0.0
    %372 = vmatpush1.msra.mxu0 0.0
    %373 = vmatprep.subr.mxu0 0.0
    %374 = vmatpush1.msra.mxu0 %v85
    %375 = vmatprep.subr.mxu0 0.0
    %376 = vmatpush1.msra.mxu0 %v84
    %377 = vmatprep.subr.mxu0 0.0
    %378 = vmatpush1.msra.mxu0 %v83
    %379 = vmatprep.subr.mxu0 0.0
    %380 = vmatpush1.msra.mxu0 %v82
    %381 = vmatprep.subr.mxu0 0.0
    %382 = vmatpush2.msra.mxu0 0.0
    %383 = vmatprep.subr.mxu0 0.0
    %384 = vmatpush2.msra.mxu0 0.0
    %385 = vmatprep.subr.mxu0 0.0
    %386 = vmatpush2.msra.mxu0 0.0
    %387 = vmatprep.subr.mxu0 0.0
    %388 = vmatpush2.msra.mxu0 0.0
    %389 = vmatprep.subr.mxu0 0.0
    %390 = vmatpush2.msra.mxu0 0.0
    %391 = vmatprep.subr.mxu0 0.0
    %392 = vmatpush2.msra.mxu0 0.0
    %393 = vmatprep.subr.mxu0 0.0
    %394 = vmatpush2.msra.mxu0 0.0
    %395 = vmatprep.subr.mxu0 0.0
    %396 = vmatpush2.msra.mxu0 0.0
    %397 = vmatprep.subr.mxu0 0.0
    %398 = vmatpush2.msra.mxu0 0.0
    %399 = vmatprep.subr.mxu0 0.0
    %400 = vmatpush2.msra.mxu0 0.0
    %401 = vmatprep.subr.mxu0 0.0
    %402 = vmatpush2.msra.mxu0 0.0
    %403 = vmatprep.subr.mxu0 0.0
    %404 = vmatpush2.msra.mxu0 0.0
    %405 = vmatprep.subr.mxu0 0.0
    %406 = vmatpush2.msra.mxu0 0.0
    %407 = vmatprep.subr.mxu0 0.0
    %408 = vmatpush2.msra.mxu0 0.0
    %409 = vmatprep.subr.mxu0 0.0
    %410 = vmatpush2.msra.mxu0 0.0
    %411 = vmatprep.subr.mxu0 0.0
    %412 = vmatpush2.msra.mxu0 0.0
    %413 = vmatprep.mubr.f32.mxu0 0.0
    %414 = vmatmul.mubr.f32.gmra.mxu0 %v98
    %v415 = vpop.f32.mrf.mxu0
    %v416 = vadd.f32 %v255, %v415
    %v417 = vpop.f32.mrf.mxu0
    %418 = vmatprep.mubr.f32.mxu0 0.0
    %419 = vmatmul.mubr.f32.gmra.mxu0 %v101
    %v420 = vpop.f32.mrf.mxu0
    %v421 = vadd.f32 %v260, %v420
    %v422 = vpop.f32.mrf.mxu0
    %423 = vdwg.mxu0
    %v424 = vxor.u32 %v416, 2147483648
    %v425 = vxor.u32 %v421, 2147483648
    %v426 = vmul.f32 %v424, 1.442695
    %v427 = vpow.pop %v426
    %v428 = vmul.f32 %v425, 1.442695
    %v429 = vpow.pop %v428
    %v430 = vadd.f32 %v427, 1.0
    %v431 = vadd.f32 %v429, 1.0
    %v432 = vrcp.pop %v430
    %v433 = vmul.f32 1.0, %v432
    %v434 = vrcp.pop %v431
    %v435 = vmul.f32 1.0, %v434
    %436 = vmatprep.subr.mxu0 0.0
    %437 = vmatpush1.msra.mxu0 0.0
    %438 = vmatprep.subr.mxu0 0.0
    %439 = vmatpush1.msra.mxu0 0.0
    %440 = vmatprep.subr.mxu0 0.0
    %441 = vmatpush1.msra.mxu0 0.0
    %442 = vmatprep.subr.mxu0 0.0
    %443 = vmatpush1.msra.mxu0 0.0
    %444 = vmatprep.subr.mxu0 0.0
    %445 = vmatpush1.msra.mxu0 0.0
    %446 = vmatprep.subr.mxu0 0.0
    %447 = vmatpush1.msra.mxu0 0.0
    %448 = vmatprep.subr.mxu0 0.0
    %449 = vmatpush1.msra.mxu0 0.0
    %450 = vmatprep.subr.mxu0 0.0
    %451 = vmatpush1.msra.mxu0 0.0
    %452 = vmatprep.subr.mxu0 0.0
    %453 = vmatpush1.msra.mxu0 0.0
    %454 = vmatprep.subr.mxu0 0.0
    %455 = vmatpush1.msra.mxu0 0.0
    %456 = vmatprep.subr.mxu0 0.0
    %457 = vmatpush1.msra.mxu0 0.0
    %458 = vmatprep.subr.mxu0 0.0
    %459 = vmatpush1.msra.mxu0 0.0
    %460 = vmatprep.subr.mxu0 0.0
    %461 = vmatpush1.msra.mxu0 %v90
    %462 = vmatprep.subr.mxu0 0.0
    %463 = vmatpush1.msra.mxu0 %v89
    %464 = vmatprep.subr.mxu0 0.0
    %465 = vmatpush1.msra.mxu0 %v88
    %466 = vmatprep.subr.mxu0 0.0
    %467 = vmatpush1.msra.mxu0 %v87
    %468 = vmatprep.subr.mxu0 0.0
    %469 = vmatpush2.msra.mxu0 0.0
    %470 = vmatprep.subr.mxu0 0.0
    %471 = vmatpush2.msra.mxu0 0.0
    %472 = vmatprep.subr.mxu0 0.0
    %473 = vmatpush2.msra.mxu0 0.0
    %474 = vmatprep.subr.mxu0 0.0
    %475 = vmatpush2.msra.mxu0 0.0
    %476 = vmatprep.subr.mxu0 0.0
    %477 = vmatpush2.msra.mxu0 0.0
    %478 = vmatprep.subr.mxu0 0.0
    %479 = vmatpush2.msra.mxu0 0.0
    %480 = vmatprep.subr.mxu0 0.0
    %481 = vmatpush2.msra.mxu0 0.0
    %482 = vmatprep.subr.mxu0 0.0
    %483 = vmatpush2.msra.mxu0 0.0
    %484 = vmatprep.subr.mxu0 0.0
    %485 = vmatpush2.msra.mxu0 0.0
    %486 = vmatprep.subr.mxu0 0.0
    %487 = vmatpush2.msra.mxu0 0.0
    %488 = vmatprep.subr.mxu0 0.0
    %489 = vmatpush2.msra.mxu0 0.0
    %490 = vmatprep.subr.mxu0 0.0
    %491 = vmatpush2.msra.mxu0 0.0
    %492 = vmatprep.subr.mxu0 0.0
    %493 = vmatpush2.msra.mxu0 0.0
    %494 = vmatprep.subr.mxu0 0.0
    %495 = vmatpush2.msra.mxu0 0.0
    %496 = vmatprep.subr.mxu0 0.0
    %497 = vmatpush2.msra.mxu0 0.0
    %498 = vmatprep.subr.mxu0 0.0
    %499 = vmatpush2.msra.mxu0 0.0
    %500 = vmatprep.mubr.f32.mxu0 0.0
    %501 = vmatmul.mubr.f32.gmra.mxu0 %v98
    %v502 = vpop.f32.mrf.mxu0
    %v503 = vadd.f32 %v335, %v502
    %v504 = vpop.f32.mrf.mxu0
    %505 = vmatprep.mubr.f32.mxu0 0.0
    %506 = vmatmul.mubr.f32.gmra.mxu0 %v101
    %v507 = vpop.f32.mrf.mxu0
    %v508 = vadd.f32 %v340, %v507
    %v509 = vpop.f32.mrf.mxu0
    %510 = vdwg.mxu0
    %v512 = vlaneseq
    %v513 = vshrl.u32 %v512, 7
    %v514 = vsub.s32 0, %v513
    %v515 = vrot.slane %v348, %v514
    %v517 = vsub.f32 %v503, %v515
    %v518 = vsub.f32 %v508, %v515
    %v519 = vxor.u32 %v517, 2147483648
    %v520 = vxor.u32 %v518, 2147483648
    %v521 = vmul.f32 %v519, 1.442695
    %v522 = vpow.pop %v521
    %v523 = vmul.f32 %v520, 1.442695
    %v524 = vpow.pop %v523
    %v525 = vadd.f32 %v522, 1.0
    %v526 = vadd.f32 %v524, 1.0
    %v527 = vrcp.pop %v525
    %v528 = vmul.f32 1.0, %v527
    %v529 = vrcp.pop %v526
    %v530 = vmul.f32 1.0, %v529
    %v531 = vmul.f32 %v433, %v170
    %v532 = vmul.f32 %v435, %v175
    %533 = vmatprep.subr.mxu0 0.0
    %534 = vmatpush1.msra.mxu0 0.0
    %535 = vmatprep.subr.mxu0 0.0
    %536 = vmatpush1.msra.mxu0 0.0
    %537 = vmatprep.subr.mxu0 0.0
    %538 = vmatpush1.msra.mxu0 0.0
    %539 = vmatprep.subr.mxu0 0.0
    %540 = vmatpush1.msra.mxu0 0.0
    %541 = vmatprep.subr.mxu0 0.0
    %542 = vmatpush1.msra.mxu0 0.0
    %543 = vmatprep.subr.mxu0 0.0
    %544 = vmatpush1.msra.mxu0 0.0
    %545 = vmatprep.subr.mxu0 0.0
    %546 = vmatpush1.msra.mxu0 0.0
    %547 = vmatprep.subr.mxu0 0.0
    %548 = vmatpush1.msra.mxu0 0.0
    %549 = vmatprep.subr.mxu0 0.0
    %550 = vmatpush1.msra.mxu0 0.0
    %551 = vmatprep.subr.mxu0 0.0
    %552 = vmatpush1.msra.mxu0 0.0
    %553 = vmatprep.subr.mxu0 0.0
    %554 = vmatpush1.msra.mxu0 0.0
    %555 = vmatprep.subr.mxu0 0.0
    %556 = vmatpush1.msra.mxu0 0.0
    %557 = vmatprep.subr.mxu0 0.0
    %558 = vmatpush1.msra.mxu0 %v347
    %559 = vmatprep.subr.mxu0 0.0
    %560 = vmatpush1.msra.mxu0 %v346
    %561 = vmatprep.subr.mxu0 0.0
    %562 = vmatpush1.msra.mxu0 %v345
    %563 = vmatprep.subr.mxu0 0.0
    %564 = vmatpush1.msra.mxu0 %v344
    %565 = vmatprep.subr.mxu0 0.0
    %566 = vmatpush2.msra.mxu0 0.0
    %567 = vmatprep.subr.mxu0 0.0
    %568 = vmatpush2.msra.mxu0 0.0
    %569 = vmatprep.subr.mxu0 0.0
    %570 = vmatpush2.msra.mxu0 0.0
    %571 = vmatprep.subr.mxu0 0.0
    %572 = vmatpush2.msra.mxu0 0.0
    %573 = vmatprep.subr.mxu0 0.0
    %574 = vmatpush2.msra.mxu0 0.0
    %575 = vmatprep.subr.mxu0 0.0
    %576 = vmatpush2.msra.mxu0 0.0
    %577 = vmatprep.subr.mxu0 0.0
    %578 = vmatpush2.msra.mxu0 0.0
    %579 = vmatprep.subr.mxu0 0.0
    %580 = vmatpush2.msra.mxu0 0.0
    %581 = vmatprep.subr.mxu0 0.0
    %582 = vmatpush2.msra.mxu0 0.0
    %583 = vmatprep.subr.mxu0 0.0
    %584 = vmatpush2.msra.mxu0 0.0
    %585 = vmatprep.subr.mxu0 0.0
    %586 = vmatpush2.msra.mxu0 0.0
    %587 = vmatprep.subr.mxu0 0.0
    %588 = vmatpush2.msra.mxu0 0.0
    %589 = vmatprep.subr.mxu0 0.0
    %590 = vmatpush2.msra.mxu0 0.0
    %591 = vmatprep.subr.mxu0 0.0
    %592 = vmatpush2.msra.mxu0 0.0
    %593 = vmatprep.subr.mxu0 0.0
    %594 = vmatpush2.msra.mxu0 0.0
    %595 = vmatprep.subr.mxu0 0.0
    %596 = vmatpush2.msra.mxu0 0.0
    %597 = vmatprep.mubr.f32.mxu0 0.0
    %598 = vmatmul.mubr.f32.gmra.mxu0 %v183
    %v599 = vpop.f32.mrf.mxu0
    %v600 = vadd.f32 %v531, %v599
    %v601 = vpop.f32.mrf.mxu0
    %602 = vmatprep.mubr.f32.mxu0 0.0
    %603 = vmatmul.mubr.f32.gmra.mxu0 %v186
    %v604 = vpop.f32.mrf.mxu0
    %v605 = vadd.f32 %v532, %v604
    %v606 = vpop.f32.mrf.mxu0
    %607 = vdwg.mxu0
    %v608 = vtanh.pop %v600
    %v609 = vtanh.pop %v605
    %v610 = vsub.f32 1.0, %v528
    %v611 = vsub.f32 1.0, %v530
    %v612 = vmul.f32 %v610, %v76
    %v613 = vmul.f32 %v611, %v77
    %v614 = vmul.f32 %v608, %v80
    %v615 = vmul.f32 %v609, %v81
    %v616 = vadd.f32 %v612, %v614
    %v617 = vadd.f32 %v613, %v615
    %618 = vst.msk [vmem:[#allocation10] sm:$0xff] %vm96, %v616
    %619 = vst.msk [vmem:[#allocation10 + $0x8] sm:$0xff] %vm96, %v617
    // Predicated region
    $region38: #{tpu_custom_call.1} parent=1 // pred_check
      _
    $region39: #{tpu_custom_call.1} parent=1 // pred_check_branch
      %621 = sbr.rel (0) target = $region41
    $region40: #{tpu_custom_call.1} parent=1 // pred_region
      %s623 = ssub.s32 256, 256
      %624 = vsyncadd [#allocation4], %s623
      %s625 = sshll.u32 [#allocation10], 4
      %s626 = int_to_ptr.vmem [resolvable:$true] %s625
      %631 = dma.vmem_to_hbm [thread:$0]  %s626, 256, %s5, [#allocation4], 128, 128, 8
    $region41: #{tpu_custom_call.1} parent=1 // pred_fallthru
      _
    // Predicated region
    $region42: #{tpu_custom_call.1} parent=1 // pred_check
      _
    $region43: #{tpu_custom_call.1} parent=1 // pred_check_branch
      %633 = sbr.rel (0) target = $region45
    $region44: #{tpu_custom_call.1} parent=1 // pred_region
      %634 = dma.done [#allocation4], 256
    $region45: #{tpu_custom_call.1} parent=1 // pred_fallthru
      _
    %635 = vsyncpa [#allocation3], 1
    %636 = vsyncpa [#allocation6], 1
    %637 = vsyncpa [#allocation9], 1
    %638 = vsyncpa [#allocation4], 1

// kernel: tpu_custom_call.1
$region0: #{tpu_custom_call.1}
  #allocation0 [shape = 'u32[]', space=smem, size = 0x4, offset = 0x4, fixed_abs, tag = 'smem constant byte address 0x4 - core index']
  #allocation1 [shape = 'u32[144,128]{1,0:T(1,128)}', space=vmem, size = 0x12000, scoped, tag = 'internal scratch']
  %s0 = inlined_call_operand.hbm [shape: f32[16,32], index: 0, kind: input, shape index: {}]
  %s1 = inlined_call_operand.hbm [shape: f32[16,32], index: 1, kind: input, shape index: {}]
  %s2 = inlined_call_operand.hbm [shape: f32[3,32,32], index: 2, kind: input, shape index: {}]
  %s3 = inlined_call_operand.hbm [shape: f32[3,32,32], index: 3, kind: input, shape index: {}]
  %s4 = inlined_call_operand.vmem [shape: f32[1,32], index: 4, kind: input, shape index: {}]
  %s5 = inlined_call_operand.hbm [shape: f32[16,32], index: 5, kind: output, shape index: {}]
  %s6 = sld [smem:[#allocation0]]
  $region46: #{tpu_custom_call.1} parent=0
    _
  %s8 = ssub.s32 1, %s6
  %s9 = scalar_select 0, %s8, %s6
  $region1: #{tpu_custom_call.1} parent=0
    #allocation2 [shape = 'u8[8192]{0}', space=vmem, size = 0x2000, scoped, tag = 'input window, operand 0, single buffered']
    #allocation3 [shape = 's32[1]{0}', space=sflag, size = 0x4, scoped, tag = 'scoped memory for tpu_custom_call.1']
    #allocation4 [shape = 's32[1]{0}', space=sflag, size = 0x4, scoped, tag = 'scoped memory for tpu_custom_call.1']
    #allocation5 [shape = 'u8[8192]{0}', space=vmem, size = 0x2000, scoped, tag = 'input window, operand 1, single buffered']
    #allocation6 [shape = 's32[1]{0}', space=sflag, size = 0x4, scoped, tag = 'scoped memory for tpu_custom_call.1']
    #allocation7 [shape = 'u8[49152]{0}', space=vmem, size = 0xc000, scoped, tag = 'input window, operand 2, single buffered']
    #allocation8 [shape = 'u8[49152]{0}', space=vmem, size = 0xc000, scoped, tag = 'input window, operand 3, single buffered']
    #allocation9 [shape = 's32[1]{0}', space=sflag, size = 0x4, scoped, tag = 'scoped memory for tpu_custom_call.1']
    #allocation10 [shape = 'u8[8192]{0}', space=vmem, size = 0x2000, scoped, tag = 'output window, operand 0, single buffered']
    %10 = vsyncpa [#allocation3], 0
    %11 = vsyncpa [#allocation6], 0
    %12 = vsyncpa [#allocation9], 0
    %13 = vsyncpa [#allocation4], 0
    // Predicated region
    $region2: #{tpu_custom_call.1} parent=1 // pred_check
      _
    $region3: #{tpu_custom_call.1} parent=1 // pred_check_branch
      %15 = sbr.rel (0) target = $region5
    $region4: #{tpu_custom_call.1} parent=1 // pred_region
      %s17 = ssub.s32 256, 256
      %18 = vsyncadd [#allocation3], %s17
      %s19 = sshll.u32 [#allocation2], 4
      %s20 = int_to_ptr.vmem [resolvable:$true] %s19
      %25 = dma.hbm_to_vmem [thread:$0]  %s0, 256, %s20, [#allocation3], 128, 128, 8
    $region5: #{tpu_custom_call.1} parent=1 // pred_fallthru
      _
    // Predicated region
    $region6: #{tpu_custom_call.1} parent=1 // pred_check
      _
    $region7: #{tpu_custom_call.1} parent=1 // pred_check_branch
      %27 = sbr.rel (0) target = $region9
    $region8: #{tpu_custom_call.1} parent=1 // pred_region
      %s29 = ssub.s32 256, 256
      %30 = vsyncadd [#allocation6], %s29
      %s31 = sshll.u32 [#allocation5], 4
      %s32 = int_to_ptr.vmem [resolvable:$true] %s31
      %37 = dma.hbm_to_vmem [thread:$0]  %s1, 256, %s32, [#allocation6], 128, 128, 8
    $region9: #{tpu_custom_call.1} parent=1 // pred_fallthru
      _
    // Predicated region
    $region10: #{tpu_custom_call.1} parent=1 // pred_check
      _
    $region11: #{tpu_custom_call.1} parent=1 // pred_check_branch
      %39 = sbr.rel (0) target = $region13
    $region12: #{tpu_custom_call.1} parent=1 // pred_region
      %s41 = ssub.s32 1536, 1536
      %42 = vsyncadd [#allocation6], %s41
      %s43 = sshll.u32 [#allocation7], 4
      %s44 = int_to_ptr.vmem [resolvable:$true] %s43
      %49 = dma.hbm_to_vmem [thread:$0]  %s2, 1536, %s44, [#allocation6], 128, 128, 8
    $region13: #{tpu_custom_call.1} parent=1 // pred_fallthru
      _
    // Predicated region
    $region14: #{tpu_custom_call.1} parent=1 // pred_check
      _
    $region15: #{tpu_custom_call.1} parent=1 // pred_check_branch
      %51 = sbr.rel (0) target = $region17
    $region16: #{tpu_custom_call.1} parent=1 // pred_region
      %s53 = ssub.s32 1536, 1536
      %54 = vsyncadd [#allocation9], %s53
      %s55 = sshll.u32 [#allocation8], 4
      %s56 = int_to_ptr.vmem [resolvable:$true] %s55
      %61 = dma.hbm_to_vmem [thread:$0]  %s3, 1536, %s56, [#allocation9], 128, 128, 8
    $region17: #{tpu_custom_call.1} parent=1 // pred_fallthru
      _
    // Predicated region
    $region18: #{tpu_custom_call.1} parent=1 // pred_check
      _
    $region19: #{tpu_custom_call.1} parent=1 // pred_check_branch
      %63 = sbr.rel (0) target = $region21
    $region20: #{tpu_custom_call.1} parent=1 // pred_region
      _
    $region21: #{tpu_custom_call.1} parent=1 // pred_fallthru
      _
    // Predicated region
    $region22: #{tpu_custom_call.1} parent=1 // pred_check
      _
    $region23: #{tpu_custom_call.1} parent=1 // pred_check_branch
      %65 = sbr.rel (0) target = $region25
    $region24: #{tpu_custom_call.1} parent=1 // pred_region
      %66 = dma.done [#allocation3], 256
    $region25: #{tpu_custom_call.1} parent=1 // pred_fallthru
      _
    // Predicated region
    $region26: #{tpu_custom_call.1} parent=1 // pred_check
      _
    $region27: #{tpu_custom_call.1} parent=1 // pred_check_branch
      %68 = sbr.rel (0) target = $region29
    $region28: #{tpu_custom_call.1} parent=1 // pred_region
      %69 = dma.done [#allocation6], 256
    $region29: #{tpu_custom_call.1} parent=1 // pred_fallthru
      _
    // Predicated region
    $region30: #{tpu_custom_call.1} parent=1 // pred_check
      _
    $region31: #{tpu_custom_call.1} parent=1 // pred_check_branch
      %71 = sbr.rel (0) target = $region33
    $region32: #{tpu_custom_call.1} parent=1 // pred_region
      %72 = dma.done [#allocation6], 1536
    $region33: #{tpu_custom_call.1} parent=1 // pred_fallthru
      _
    // Predicated region
    $region34: #{tpu_custom_call.1} parent=1 // pred_check
      _
    $region35: #{tpu_custom_call.1} parent=1 // pred_check_branch
      %74 = sbr.rel (0) target = $region37
    $region36: #{tpu_custom_call.1} parent=1 // pred_region
      %75 = dma.done [#allocation9], 1536
    $region37: #{tpu_custom_call.1} parent=1 // pred_fallthru
      _
    %v76 = vld [vmem:[#allocation2] sm:$0xff]
    %v77 = vld [vmem:[#allocation2 + $0x8] sm:$0xff]
    %v78 = vld [vmem:[#allocation5] sm:$0xff]
    %v79 = vld [vmem:[#allocation5 + $0x8] sm:$0xff]
    %v80 = vmax.f32 %v78, 0.0
    %v81 = vmax.f32 %v79, 0.0
    %v82 = vld [vmem:[#allocation7] sm:$0xff]
    %v83 = vld [vmem:[#allocation7 + $0x8] sm:$0xff]
    %v84 = vld [vmem:[#allocation7 + $0x10] sm:$0xff]
    %v85 = vld [vmem:[#allocation7 + $0x18] sm:$0xff]
    %s86 = scalar_lea.vmem [#allocation7], 32
    %v87 = vld [vmem:[%s86] sm:$0xff]
    %v88 = vld [vmem:[%s86 + $0x8] sm:$0xff]
    %v89 = vld [vmem:[%s86 + $0x10] sm:$0xff]
    %v90 = vld [vmem:[%s86 + $0x18] sm:$0xff]
    %s91 = scalar_lea.vmem [#allocation7], 64
    %v92 = vld [vmem:[%s91] sm:$0xff]
    %v93 = vld [vmem:[%s91 + $0x8] sm:$0xff]
    %v94 = vld [vmem:[%s91 + $0x10] sm:$0xff]
    %v95 = vld [vmem:[%s91 + $0x18] sm:$0xff]
    %vm96 = vcmask 261120
    %v98 = vsel %vm96, %v76, 0
    %v101 = vsel %vm96, %v77, 0
    %103 = vmatprep.subr.mxu0 0.0
    %104 = vmatpush1.msra.mxu0 0.0
    %105 = vmatprep.subr.mxu0 0.0
    %106 = vmatpush1.msra.mxu0 0.0
    %107 = vmatprep.subr.mxu0 0.0
    %108 = vmatpush1.msra.mxu0 0.0
    %109 = vmatprep.subr.mxu0 0.0
    %110 = vmatpush1.msra.mxu0 0.0
    %111 = vmatprep.subr.mxu0 0.0
    %112 = vmatpush1.msra.mxu0 0.0
    %113 = vmatprep.subr.mxu0 0.0
    %114 = vmatpush1.msra.mxu0 0.0
    %115 = vmatprep.subr.mxu0 0.0
    %116 = vmatpush1.msra.mxu0 0.0
    %117 = vmatprep.subr.mxu0 0.0
    %118 = vmatpush1.msra.mxu0 0.0
    %119 = vmatprep.subr.mxu0 0.0
    %120 = vmatpush1.msra.mxu0 0.0
    %121 = vmatprep.subr.mxu0 0.0
    %122 = vmatpush1.msra.mxu0 0.0
    %123 = vmatprep.subr.mxu0 0.0
    %124 = vmatpush1.msra.mxu0 0.0
    %125 = vmatprep.subr.mxu0 0.0
    %126 = vmatpush1.msra.mxu0 0.0
    %127 = vmatprep.subr.mxu0 0.0
    %128 = vmatpush1.msra.mxu0 %v95
    %129 = vmatprep.subr.mxu0 0.0
    %130 = vmatpush1.msra.mxu0 %v94
    %131 = vmatprep.subr.mxu0 0.0
    %132 = vmatpush1.msra.mxu0 %v93
    %133 = vmatprep.subr.mxu0 0.0
    %134 = vmatpush1.msra.mxu0 %v92
    %135 = vmatprep.subr.mxu0 0.0
    %136 = vmatpush2.msra.mxu0 0.0
    %137 = vmatprep.subr.mxu0 0.0
    %138 = vmatpush2.msra.mxu0 0.0
    %139 = vmatprep.subr.mxu0 0.0
    %140 = vmatpush2.msra.mxu0 0.0
    %141 = vmatprep.subr.mxu0 0.0
    %142 = vmatpush2.msra.mxu0 0.0
    %143 = vmatprep.subr.mxu0 0.0
    %144 = vmatpush2.msra.mxu0 0.0
    %145 = vmatprep.subr.mxu0 0.0
    %146 = vmatpush2.msra.mxu0 0.0
    %147 = vmatprep.subr.mxu0 0.0
    %148 = vmatpush2.msra.mxu0 0.0
    %149 = vmatprep.subr.mxu0 0.0
    %150 = vmatpush2.msra.mxu0 0.0
    %151 = vmatprep.subr.mxu0 0.0
    %152 = vmatpush2.msra.mxu0 0.0
    %153 = vmatprep.subr.mxu0 0.0
    %154 = vmatpush2.msra.mxu0 0.0
    %155 = vmatprep.subr.mxu0 0.0
    %156 = vmatpush2.msra.mxu0 0.0
    %157 = vmatprep.subr.mxu0 0.0
    %158 = vmatpush2.msra.mxu0 0.0
    %159 = vmatprep.subr.mxu0 0.0
    %160 = vmatpush2.msra.mxu0 0.0
    %161 = vmatprep.subr.mxu0 0.0
    %162 = vmatpush2.msra.mxu0 0.0
    %163 = vmatprep.subr.mxu0 0.0
    %164 = vmatpush2.msra.mxu0 0.0
    %165 = vmatprep.subr.mxu0 0.0
    %166 = vmatpush2.msra.mxu0 0.0
    %167 = vmatprep.mubr.f32.mxu0 0.0
    %168 = vmatmul.mubr.f32.gmra.mxu0 %v98
    %v169 = vpop.f32.mrf.mxu0
    %v170 = vadd.f32 0.0, %v169
    %v171 = vpop.f32.mrf.mxu0
    %172 = vmatprep.mubr.f32.mxu0 0.0
    %173 = vmatmul.mubr.f32.gmra.mxu0 %v101
    %v174 = vpop.f32.mrf.mxu0
    %v175 = vadd.f32 0.0, %v174
    %v176 = vpop.f32.mrf.mxu0
    %177 = vdwg.mxu0
    %v178 = vld [vmem:[#allocation8] sm:$0xff]
    %v179 = vld [vmem:[#allocation8 + $0x8] sm:$0xff]
    %v180 = vld [vmem:[#allocation8 + $0x10] sm:$0xff]
    %v181 = vld [vmem:[#allocation8 + $0x18] sm:$0xff]
    %v183 = vsel %vm96, %v80, 0
    %v186 = vsel %vm96, %v81, 0
    %188 = vmatprep.subr.mxu0 0.0
    %189 = vmatpush1.msra.mxu0 0.0
    %190 = vmatprep.subr.mxu0 0.0
    %191 = vmatpush1.msra.mxu0 0.0
    %192 = vmatprep.subr.mxu0 0.0
    %193 = vmatpush1.msra.mxu0 0.0
    %194 = vmatprep.subr.mxu0 0.0
    %195 = vmatpush1.msra.mxu0 0.0
    %196 = vmatprep.subr.mxu0 0.0
    %197 = vmatpush1.msra.mxu0 0.0
    %198 = vmatprep.subr.mxu0 0.0
    %199 = vmatpush1.msra.mxu0 0.0
    %200 = vmatprep.subr.mxu0 0.0
    %201 = vmatpush1.msra.mxu0 0.0
    %202 = vmatprep.subr.mxu0 0.0
    %203 = vmatpush1.msra.mxu0 0.0
    %204 = vmatprep.subr.mxu0 0.0
    %205 = vmatpush1.msra.mxu0 0.0
    %206 = vmatprep.subr.mxu0 0.0
    %207 = vmatpush1.msra.mxu0 0.0
    %208 = vmatprep.subr.mxu0 0.0
    %209 = vmatpush1.msra.mxu0 0.0
    %210 = vmatprep.subr.mxu0 0.0
    %211 = vmatpush1.msra.mxu0 0.0
    %212 = vmatprep.subr.mxu0 0.0
    %213 = vmatpush1.msra.mxu0 %v181
    %214 = vmatprep.subr.mxu0 0.0
    %215 = vmatpush1.msra.mxu0 %v180
    %216 = vmatprep.subr.mxu0 0.0
    %217 = vmatpush1.msra.mxu0 %v179
    %218 = vmatprep.subr.mxu0 0.0
    %219 = vmatpush1.msra.mxu0 %v178
    %220 = vmatprep.subr.mxu0 0.0
    %221 = vmatpush2.msra.mxu0 0.0
    %222 = vmatprep.subr.mxu0 0.0
    %223 = vmatpush2.msra.mxu0 0.0
    %224 = vmatprep.subr.mxu0 0.0
    %225 = vmatpush2.msra.mxu0 0.0
    %226 = vmatprep.subr.mxu0 0.0
    %227 = vmatpush2.msra.mxu0 0.0
    %228 = vmatprep.subr.mxu0 0.0
    %229 = vmatpush2.msra.mxu0 0.0
    %230 = vmatprep.subr.mxu0 0.0
    %231 = vmatpush2.msra.mxu0 0.0
    %232 = vmatprep.subr.mxu0 0.0
    %233 = vmatpush2.msra.mxu0 0.0
    %234 = vmatprep.subr.mxu0 0.0
    %235 = vmatpush2.msra.mxu0 0.0
    %236 = vmatprep.subr.mxu0 0.0
    %237 = vmatpush2.msra.mxu0 0.0
    %238 = vmatprep.subr.mxu0 0.0
    %239 = vmatpush2.msra.mxu0 0.0
    %240 = vmatprep.subr.mxu0 0.0
    %241 = vmatpush2.msra.mxu0 0.0
    %242 = vmatprep.subr.mxu0 0.0
    %243 = vmatpush2.msra.mxu0 0.0
    %244 = vmatprep.subr.mxu0 0.0
    %245 = vmatpush2.msra.mxu0 0.0
    %246 = vmatprep.subr.mxu0 0.0
    %247 = vmatpush2.msra.mxu0 0.0
    %248 = vmatprep.subr.mxu0 0.0
    %249 = vmatpush2.msra.mxu0 0.0
    %250 = vmatprep.subr.mxu0 0.0
    %251 = vmatpush2.msra.mxu0 0.0
    %252 = vmatprep.mubr.f32.mxu0 0.0
    %253 = vmatmul.mubr.f32.gmra.mxu0 %v183
    %v254 = vpop.f32.mrf.mxu0
    %v255 = vadd.f32 0.0, %v254
    %v256 = vpop.f32.mrf.mxu0
    %257 = vmatprep.mubr.f32.mxu0 0.0
    %258 = vmatmul.mubr.f32.gmra.mxu0 %v186
    %v259 = vpop.f32.mrf.mxu0
    %v260 = vadd.f32 0.0, %v259
    %v261 = vpop.f32.mrf.mxu0
    %262 = vdwg.mxu0
    %s263 = scalar_lea.vmem [#allocation8], 32
    %v264 = vld [vmem:[%s263] sm:$0xff]
    %v265 = vld [vmem:[%s263 + $0x8] sm:$0xff]
    %v266 = vld [vmem:[%s263 + $0x10] sm:$0xff]
    %v267 = vld [vmem:[%s263 + $0x18] sm:$0xff]
    %268 = vmatprep.subr.mxu0 0.0
    %269 = vmatpush1.msra.mxu0 0.0
    %270 = vmatprep.subr.mxu0 0.0
    %271 = vmatpush1.msra.mxu0 0.0
    %272 = vmatprep.subr.mxu0 0.0
    %273 = vmatpush1.msra.mxu0 0.0
    %274 = vmatprep.subr.mxu0 0.0
    %275 = vmatpush1.msra.mxu0 0.0
    %276 = vmatprep.subr.mxu0 0.0
    %277 = vmatpush1.msra.mxu0 0.0
    %278 = vmatprep.subr.mxu0 0.0
    %279 = vmatpush1.msra.mxu0 0.0
    %280 = vmatprep.subr.mxu0 0.0
    %281 = vmatpush1.msra.mxu0 0.0
    %282 = vmatprep.subr.mxu0 0.0
    %283 = vmatpush1.msra.mxu0 0.0
    %284 = vmatprep.subr.mxu0 0.0
    %285 = vmatpush1.msra.mxu0 0.0
    %286 = vmatprep.subr.mxu0 0.0
    %287 = vmatpush1.msra.mxu0 0.0
    %288 = vmatprep.subr.mxu0 0.0
    %289 = vmatpush1.msra.mxu0 0.0
    %290 = vmatprep.subr.mxu0 0.0
    %291 = vmatpush1.msra.mxu0 0.0
    %292 = vmatprep.subr.mxu0 0.0
    %293 = vmatpush1.msra.mxu0 %v267
    %294 = vmatprep.subr.mxu0 0.0
    %295 = vmatpush1.msra.mxu0 %v266
    %296 = vmatprep.subr.mxu0 0.0
    %297 = vmatpush1.msra.mxu0 %v265
    %298 = vmatprep.subr.mxu0 0.0
    %299 = vmatpush1.msra.mxu0 %v264
    %300 = vmatprep.subr.mxu0 0.0
    %301 = vmatpush2.msra.mxu0 0.0
    %302 = vmatprep.subr.mxu0 0.0
    %303 = vmatpush2.msra.mxu0 0.0
    %304 = vmatprep.subr.mxu0 0.0
    %305 = vmatpush2.msra.mxu0 0.0
    %306 = vmatprep.subr.mxu0 0.0
    %307 = vmatpush2.msra.mxu0 0.0
    %308 = vmatprep.subr.mxu0 0.0
    %309 = vmatpush2.msra.mxu0 0.0
    %310 = vmatprep.subr.mxu0 0.0
    %311 = vmatpush2.msra.mxu0 0.0
    %312 = vmatprep.subr.mxu0 0.0
    %313 = vmatpush2.msra.mxu0 0.0
    %314 = vmatprep.subr.mxu0 0.0
    %315 = vmatpush2.msra.mxu0 0.0
    %316 = vmatprep.subr.mxu0 0.0
    %317 = vmatpush2.msra.mxu0 0.0
    %318 = vmatprep.subr.mxu0 0.0
    %319 = vmatpush2.msra.mxu0 0.0
    %320 = vmatprep.subr.mxu0 0.0
    %321 = vmatpush2.msra.mxu0 0.0
    %322 = vmatprep.subr.mxu0 0.0
    %323 = vmatpush2.msra.mxu0 0.0
    %324 = vmatprep.subr.mxu0 0.0
    %325 = vmatpush2.msra.mxu0 0.0
    %326 = vmatprep.subr.mxu0 0.0
    %327 = vmatpush2.msra.mxu0 0.0
    %328 = vmatprep.subr.mxu0 0.0
    %329 = vmatpush2.msra.mxu0 0.0
    %330 = vmatprep.subr.mxu0 0.0
    %331 = vmatpush2.msra.mxu0 0.0
    %332 = vmatprep.mubr.f32.mxu0 0.0
    %333 = vmatmul.mubr.f32.gmra.mxu0 %v183
    %v334 = vpop.f32.mrf.mxu0
    %v335 = vadd.f32 0.0, %v334
    %v336 = vpop.f32.mrf.mxu0
    %337 = vmatprep.mubr.f32.mxu0 0.0
    %338 = vmatmul.mubr.f32.gmra.mxu0 %v186
    %v339 = vpop.f32.mrf.mxu0
    %v340 = vadd.f32 0.0, %v339
    %v341 = vpop.f32.mrf.mxu0
    %342 = vdwg.mxu0
    %s343 = scalar_lea.vmem [#allocation8], 64
    %v344 = vld [vmem:[%s343] sm:$0xff]
    %v345 = vld [vmem:[%s343 + $0x8] sm:$0xff]
    %v346 = vld [vmem:[%s343 + $0x10] sm:$0xff]
    %v347 = vld [vmem:[%s343 + $0x18] sm:$0xff]
    %v348 = vld [vmem:[%s4] sm:$0x1]
    %349 = vmatprep.subr.mxu0 0.0
    %350 = vmatpush1.msra.mxu0 0.0
    %351 = vmatprep.subr.mxu0 0.0
    %352 = vmatpush1.msra.mxu0 0.0
    %353 = vmatprep.subr.mxu0 0.0
    %354 = vmatpush1.msra.mxu0 0.0
    %355 = vmatprep.subr.mxu0 0.0
    %356 = vmatpush1.msra.mxu0 0.0
    %357 = vmatprep.subr.mxu0 0.0
    %358 = vmatpush1.msra.mxu0 0.0
    %359 = vmatprep.subr.mxu0 0.0
    %360 = vmatpush1.msra.mxu0 0.0
    %361 = vmatprep.subr.mxu0 0.0
    %362 = vmatpush1.msra.mxu0 0.0
    %363 = vmatprep.subr.mxu0 0.0
    %364 = vmatpush1.msra.mxu0 0.0
    %365 = vmatprep.subr.mxu0 0.0
    %366 = vmatpush1.msra.mxu0 0.0
    %367 = vmatprep.subr.mxu0 0.0
    %368 = vmatpush1.msra.mxu0 0.0
    %369 = vmatprep.subr.mxu0 0.0
    %370 = vmatpush1.msra.mxu0 0.0
    %371 = vmatprep.subr.mxu0 0.0
    %372 = vmatpush1.msra.mxu0 0.0
    %373 = vmatprep.subr.mxu0 0.0
    %374 = vmatpush1.msra.mxu0 %v85
    %375 = vmatprep.subr.mxu0 0.0
    %376 = vmatpush1.msra.mxu0 %v84
    %377 = vmatprep.subr.mxu0 0.0
    %378 = vmatpush1.msra.mxu0 %v83
    %379 = vmatprep.subr.mxu0 0.0
    %380 = vmatpush1.msra.mxu0 %v82
    %381 = vmatprep.subr.mxu0 0.0
    %382 = vmatpush2.msra.mxu0 0.0
    %383 = vmatprep.subr.mxu0 0.0
    %384 = vmatpush2.msra.mxu0 0.0
    %385 = vmatprep.subr.mxu0 0.0
    %386 = vmatpush2.msra.mxu0 0.0
    %387 = vmatprep.subr.mxu0 0.0
    %388 = vmatpush2.msra.mxu0 0.0
    %389 = vmatprep.subr.mxu0 0.0
    %390 = vmatpush2.msra.mxu0 0.0
    %391 = vmatprep.subr.mxu0 0.0
    %392 = vmatpush2.msra.mxu0 0.0
    %393 = vmatprep.subr.mxu0 0.0
    %394 = vmatpush2.msra.mxu0 0.0
    %395 = vmatprep.subr.mxu0 0.0
    %396 = vmatpush2.msra.mxu0 0.0
    %397 = vmatprep.subr.mxu0 0.0
    %398 = vmatpush2.msra.mxu0 0.0
    %399 = vmatprep.subr.mxu0 0.0
    %400 = vmatpush2.msra.mxu0 0.0
    %401 = vmatprep.subr.mxu0 0.0
    %402 = vmatpush2.msra.mxu0 0.0
    %403 = vmatprep.subr.mxu0 0.0
    %404 = vmatpush2.msra.mxu0 0.0
    %405 = vmatprep.subr.mxu0 0.0
    %406 = vmatpush2.msra.mxu0 0.0
    %407 = vmatprep.subr.mxu0 0.0
    %408 = vmatpush2.msra.mxu0 0.0
    %409 = vmatprep.subr.mxu0 0.0
    %410 = vmatpush2.msra.mxu0 0.0
    %411 = vmatprep.subr.mxu0 0.0
    %412 = vmatpush2.msra.mxu0 0.0
    %413 = vmatprep.mubr.f32.mxu0 0.0
    %414 = vmatmul.mubr.f32.gmra.mxu0 %v98
    %v415 = vpop.f32.mrf.mxu0
    %v416 = vadd.f32 %v255, %v415
    %v417 = vpop.f32.mrf.mxu0
    %418 = vmatprep.mubr.f32.mxu0 0.0
    %419 = vmatmul.mubr.f32.gmra.mxu0 %v101
    %v420 = vpop.f32.mrf.mxu0
    %v421 = vadd.f32 %v260, %v420
    %v422 = vpop.f32.mrf.mxu0
    %423 = vdwg.mxu0
    %v424 = vxor.u32 %v416, 2147483648
    %v425 = vxor.u32 %v421, 2147483648
    %v426 = vmul.f32 %v424, 1.442695
    %v427 = vpow.pop %v426
    %v428 = vmul.f32 %v425, 1.442695
    %v429 = vpow.pop %v428
    %v430 = vadd.f32 %v427, 1.0
    %v431 = vadd.f32 %v429, 1.0
    %v432 = vrcp.pop %v430
    %v433 = vmul.f32 1.0, %v432
    %v434 = vrcp.pop %v431
    %v435 = vmul.f32 1.0, %v434
    %436 = vmatprep.subr.mxu0 0.0
    %437 = vmatpush1.msra.mxu0 0.0
    %438 = vmatprep.subr.mxu0 0.0
    %439 = vmatpush1.msra.mxu0 0.0
    %440 = vmatprep.subr.mxu0 0.0
    %441 = vmatpush1.msra.mxu0 0.0
    %442 = vmatprep.subr.mxu0 0.0
    %443 = vmatpush1.msra.mxu0 0.0
    %444 = vmatprep.subr.mxu0 0.0
    %445 = vmatpush1.msra.mxu0 0.0
    %446 = vmatprep.subr.mxu0 0.0
    %447 = vmatpush1.msra.mxu0 0.0
    %448 = vmatprep.subr.mxu0 0.0
    %449 = vmatpush1.msra.mxu0 0.0
    %450 = vmatprep.subr.mxu0 0.0
    %451 = vmatpush1.msra.mxu0 0.0
    %452 = vmatprep.subr.mxu0 0.0
    %453 = vmatpush1.msra.mxu0 0.0
    %454 = vmatprep.subr.mxu0 0.0
    %455 = vmatpush1.msra.mxu0 0.0
    %456 = vmatprep.subr.mxu0 0.0
    %457 = vmatpush1.msra.mxu0 0.0
    %458 = vmatprep.subr.mxu0 0.0
    %459 = vmatpush1.msra.mxu0 0.0
    %460 = vmatprep.subr.mxu0 0.0
    %461 = vmatpush1.msra.mxu0 %v90
    %462 = vmatprep.subr.mxu0 0.0
    %463 = vmatpush1.msra.mxu0 %v89
    %464 = vmatprep.subr.mxu0 0.0
    %465 = vmatpush1.msra.mxu0 %v88
    %466 = vmatprep.subr.mxu0 0.0
    %467 = vmatpush1.msra.mxu0 %v87
    %468 = vmatprep.subr.mxu0 0.0
    %469 = vmatpush2.msra.mxu0 0.0
    %470 = vmatprep.subr.mxu0 0.0
    %471 = vmatpush2.msra.mxu0 0.0
    %472 = vmatprep.subr.mxu0 0.0
    %473 = vmatpush2.msra.mxu0 0.0
    %474 = vmatprep.subr.mxu0 0.0
    %475 = vmatpush2.msra.mxu0 0.0
    %476 = vmatprep.subr.mxu0 0.0
    %477 = vmatpush2.msra.mxu0 0.0
    %478 = vmatprep.subr.mxu0 0.0
    %479 = vmatpush2.msra.mxu0 0.0
    %480 = vmatprep.subr.mxu0 0.0
    %481 = vmatpush2.msra.mxu0 0.0
    %482 = vmatprep.subr.mxu0 0.0
    %483 = vmatpush2.msra.mxu0 0.0
    %484 = vmatprep.subr.mxu0 0.0
    %485 = vmatpush2.msra.mxu0 0.0
    %486 = vmatprep.subr.mxu0 0.0
    %487 = vmatpush2.msra.mxu0 0.0
    %488 = vmatprep.subr.mxu0 0.0
    %489 = vmatpush2.msra.mxu0 0.0
    %490 = vmatprep.subr.mxu0 0.0
    %491 = vmatpush2.msra.mxu0 0.0
    %492 = vmatprep.subr.mxu0 0.0
    %493 = vmatpush2.msra.mxu0 0.0
    %494 = vmatprep.subr.mxu0 0.0
    %495 = vmatpush2.msra.mxu0 0.0
    %496 = vmatprep.subr.mxu0 0.0
    %497 = vmatpush2.msra.mxu0 0.0
    %498 = vmatprep.subr.mxu0 0.0
    %499 = vmatpush2.msra.mxu0 0.0
    %500 = vmatprep.mubr.f32.mxu0 0.0
    %501 = vmatmul.mubr.f32.gmra.mxu0 %v98
    %v502 = vpop.f32.mrf.mxu0
    %v503 = vadd.f32 %v335, %v502
    %v504 = vpop.f32.mrf.mxu0
    %505 = vmatprep.mubr.f32.mxu0 0.0
    %506 = vmatmul.mubr.f32.gmra.mxu0 %v101
    %v507 = vpop.f32.mrf.mxu0
    %v508 = vadd.f32 %v340, %v507
    %v509 = vpop.f32.mrf.mxu0
    %510 = vdwg.mxu0
    %v512 = vlaneseq
    %v513 = vshrl.u32 %v512, 7
    %v514 = vsub.s32 0, %v513
    %v515 = vrot.slane %v348, %v514
    %v517 = vsub.f32 %v503, %v515
    %v518 = vsub.f32 %v508, %v515
    %v519 = vxor.u32 %v517, 2147483648
    %v520 = vxor.u32 %v518, 2147483648
    %v521 = vmul.f32 %v519, 1.442695
    %v522 = vpow.pop %v521
    %v523 = vmul.f32 %v520, 1.442695
    %v524 = vpow.pop %v523
    %v525 = vadd.f32 %v522, 1.0
    %v526 = vadd.f32 %v524, 1.0
    %v527 = vrcp.pop %v525
    %v528 = vmul.f32 1.0, %v527
    %v529 = vrcp.pop %v526
    %v530 = vmul.f32 1.0, %v529
    %v531 = vmul.f32 %v433, %v170
    %v532 = vmul.f32 %v435, %v175
    %533 = vmatprep.subr.mxu0 0.0
    %534 = vmatpush1.msra.mxu0 0.0
    %535 = vmatprep.subr.mxu0 0.0
    %536 = vmatpush1.msra.mxu0 0.0
    %537 = vmatprep.subr.mxu0 0.0
    %538 = vmatpush1.msra.mxu0 0.0
    %539 = vmatprep.subr.mxu0 0.0
    %540 = vmatpush1.msra.mxu0 0.0
    %541 = vmatprep.subr.mxu0 0.0
    %542 = vmatpush1.msra.mxu0 0.0
    %543 = vmatprep.subr.mxu0 0.0
    %544 = vmatpush1.msra.mxu0 0.0
    %545 = vmatprep.subr.mxu0 0.0
    %546 = vmatpush1.msra.mxu0 0.0
    %547 = vmatprep.subr.mxu0 0.0
    %548 = vmatpush1.msra.mxu0 0.0
    %549 = vmatprep.subr.mxu0 0.0
    %550 = vmatpush1.msra.mxu0 0.0
    %551 = vmatprep.subr.mxu0 0.0
    %552 = vmatpush1.msra.mxu0 0.0
    %553 = vmatprep.subr.mxu0 0.0
    %554 = vmatpush1.msra.mxu0 0.0
    %555 = vmatprep.subr.mxu0 0.0
    %556 = vmatpush1.msra.mxu0 0.0
    %557 = vmatprep.subr.mxu0 0.0
    %558 = vmatpush1.msra.mxu0 %v347
    %559 = vmatprep.subr.mxu0 0.0
    %560 = vmatpush1.msra.mxu0 %v346
    %561 = vmatprep.subr.mxu0 0.0
    %562 = vmatpush1.msra.mxu0 %v345
    %563 = vmatprep.subr.mxu0 0.0
    %564 = vmatpush1.msra.mxu0 %v344
    %565 = vmatprep.subr.mxu0 0.0
    %566 = vmatpush2.msra.mxu0 0.0
    %567 = vmatprep.subr.mxu0 0.0
    %568 = vmatpush2.msra.mxu0 0.0
    %569 = vmatprep.subr.mxu0 0.0
    %570 = vmatpush2.msra.mxu0 0.0
    %571 = vmatprep.subr.mxu0 0.0
    %572 = vmatpush2.msra.mxu0 0.0
    %573 = vmatprep.subr.mxu0 0.0
    %574 = vmatpush2.msra.mxu0 0.0
    %575 = vmatprep.subr.mxu0 0.0
    %576 = vmatpush2.msra.mxu0 0.0
    %577 = vmatprep.subr.mxu0 0.0
    %578 = vmatpush2.msra.mxu0 0.0
    %579 = vmatprep.subr.mxu0 0.0
    %580 = vmatpush2.msra.mxu0 0.0
    %581 = vmatprep.subr.mxu0 0.0
    %582 = vmatpush2.msra.mxu0 0.0
    %583 = vmatprep.subr.mxu0 0.0
    %584 = vmatpush2.msra.mxu0 0.0
    %585 = vmatprep.subr.mxu0 0.0
    %586 = vmatpush2.msra.mxu0 0.0
    %587 = vmatprep.subr.mxu0 0.0
    %588 = vmatpush2.msra.mxu0 0.0
    %589 = vmatprep.subr.mxu0 0.0
    %590 = vmatpush2.msra.mxu0 0.0
    %591 = vmatprep.subr.mxu0 0.0
    %592 = vmatpush2.msra.mxu0 0.0
    %593 = vmatprep.subr.mxu0 0.0
    %594 = vmatpush2.msra.mxu0 0.0
    %595 = vmatprep.subr.mxu0 0.0
    %596 = vmatpush2.msra.mxu0 0.0
    %597 = vmatprep.mubr.f32.mxu0 0.0
    %598 = vmatmul.mubr.f32.gmra.mxu0 %v183
    %v599 = vpop.f32.mrf.mxu0
    %v600 = vadd.f32 %v531, %v599
    %v601 = vpop.f32.mrf.mxu0
    %602 = vmatprep.mubr.f32.mxu0 0.0
    %603 = vmatmul.mubr.f32.gmra.mxu0 %v186
    %v604 = vpop.f32.mrf.mxu0
    %v605 = vadd.f32 %v532, %v604
    %v606 = vpop.f32.mrf.mxu0
    %607 = vdwg.mxu0
    %v608 = vtanh.pop %v600
    %v609 = vtanh.pop %v605
    %v610 = vsub.f32 1.0, %v528
    %v611 = vsub.f32 1.0, %v530
    %v612 = vmul.f32 %v610, %v76
    %v613 = vmul.f32 %v611, %v77
    %v614 = vmul.f32 %v608, %v80
    %v615 = vmul.f32 %v609, %v81
    %v616 = vadd.f32 %v612, %v614
    %v617 = vadd.f32 %v613, %v615
    %618 = vst.msk [vmem:[#allocation10] sm:$0xff] %vm96, %v616
    %619 = vst.msk [vmem:[#allocation10 + $0x8] sm:$0xff] %vm96, %v617
    // Predicated region
    $region38: #{tpu_custom_call.1} parent=1 // pred_check
      _
    $region39: #{tpu_custom_call.1} parent=1 // pred_check_branch
      %621 = sbr.rel (0) target = $region41
    $region40: #{tpu_custom_call.1} parent=1 // pred_region
      %s623 = ssub.s32 256, 256
      %624 = vsyncadd [#allocation4], %s623
      %s625 = sshll.u32 [#allocation10], 4
      %s626 = int_to_ptr.vmem [resolvable:$true] %s625
      %631 = dma.vmem_to_hbm [thread:$0]  %s626, 256, %s5, [#allocation4], 128, 128, 8
    $region41: #{tpu_custom_call.1} parent=1 // pred_fallthru
      _
    // Predicated region
    $region42: #{tpu_custom_call.1} parent=1 // pred_check
      _
    $region43: #{tpu_custom_call.1} parent=1 // pred_check_branch
      %633 = sbr.rel (0) target = $region45
    $region44: #{tpu_custom_call.1} parent=1 // pred_region
      %634 = dma.done [#allocation4], 256
    $region45: #{tpu_custom_call.1} parent=1 // pred_fallthru
      _
    %635 = vsyncpa [#allocation3], 1
    %636 = vsyncpa [#allocation6], 1
    %637 = vsyncpa [#allocation9], 1
    %638 = vsyncpa [#allocation4], 1

</llo_original>
